<compile_context>
chip_gen: v7x
topology: tpu7x:2x2x1
jax: 0.10.0
libtpu: 0.0.40
codegen_flags: <defaults>
</compile_context>

<pallas_src>
import functools

import jax
import jax.numpy as jnp
from jax.experimental import pallas as pl
from jax.experimental.pallas import tpu as pltpu


# ------------------------------ fused Pallas kernel ------------------------- #

def _mha_fused_kernel(x_ref, wq_ref, wk_ref, wv_ref, wo_ref,
                      cos_ref, sin_ref, rp_ref, o_ref,
                      *, num_heads, scale, use_rope):
    f32 = jnp.float32
    x = x_ref[...]                                               # (S, H)

    # Fused Q/K/V projections; weights are pre-transposed to (IN, OUT) so this
    # is a plain x @ W (contraction on the weight's leading dim), lane-dense.
    q = jnp.dot(x, wq_ref[...], preferred_element_type=f32)      # (S, H)
    k = jnp.dot(x, wk_ref[...], preferred_element_type=f32)      # (S, H)
    v = jnp.dot(x, wv_ref[...], preferred_element_type=f32)      # (S, H)

    if use_rope:
        cos = cos_ref[...]                                       # (S, H), per-head tiled
        sin = sin_ref[...]
        rp = rp_ref[...]                                         # (H, H) block-diag rotate_half
        # rotate_half(q) per head == q @ rp (MXU), keeps the (S, H) slab lane-dense.
        q = q * cos + jnp.dot(q, rp, preferred_element_type=f32) * sin
        k = k * cos + jnp.dot(k, rp, preferred_element_type=f32) * sin

    # Fold the softmax scale once into q (linear, so equivalent to scaling scores).
    q = q * scale

    S, H = x.shape
    hd = H // num_heads
    head_outs = []
    # Heads are statically unrolled inside this single grid step (trip count = 4
    # here), instead of 1 grid step per head as before.
    for h in range(num_heads):
        sl = slice(h * hd, (h + 1) * hd)
        qh, kh, vh = q[:, sl], k[:, sl], v[:, sl]                # (S, hd)
        s = jax.lax.dot_general(qh, kh, (((1,), (1,)), ((), ())),
                                preferred_element_type=f32)      # (S, S)
        s = s - jnp.max(s, axis=-1, keepdims=True)
        p = jnp.exp(s)
        p = p * pl.reciprocal(jnp.sum(p, axis=-1, keepdims=True), approx=True)
        head_outs.append(jnp.dot(p, vh, preferred_element_type=f32))
    attn = jnp.concatenate(head_outs, axis=-1)                   # (S, H) lane-dense

    # out_proj fused in; single lane-dense (S, H) store.
    o_ref[...] = jnp.dot(attn, wo_ref[...],
                         preferred_element_type=f32).astype(o_ref.dtype)


# ------------------------------ one-time preparation ------------------------ #

def rope_tables(seq_len, head_dim, base=10000.0, dtype=jnp.float32):
    inv_freq = 1.0 / (base ** (jnp.arange(0, head_dim, 2, dtype=dtype) / head_dim))
    t = jnp.arange(seq_len, dtype=dtype)
    freqs = jnp.outer(t, inv_freq)                               # (S, hd/2)
    emb = jnp.concatenate([freqs, freqs], axis=-1)               # (S, hd)
    return jnp.cos(emb), jnp.sin(emb)


def prepare_mha(params, *, num_heads, seq_len):
    """One-time prep (outside the forward): transpose weights to (IN, OUT),
    pre-tile the RoPE cos/sin tables per head, and build the block-diagonal
    rotate_half matrix so RoPE runs lane-dense on the MXU inside the kernel."""
    H = params["wq"].shape[0]
    hd = H // num_heads
    cos, sin = rope_tables(seq_len, hd)

    half = hd // 2
    eye = jnp.eye(half, dtype=jnp.float32)
    zero = jnp.zeros((half, half), dtype=jnp.float32)
    # rotate_half(t) == t @ R with R = [[0, I], [-I, 0]]
    R = jnp.block([[zero, eye], [-eye, zero]])
    rope_perm = jnp.kron(jnp.eye(num_heads, dtype=jnp.float32), R)   # (H, H)

    return {
        "wq_t": params["wq"].T, "wk_t": params["wk"].T,
        "wv_t": params["wv"].T, "wo_t": params["wo"].T,
        "cos": jnp.tile(cos, (1, num_heads)),                    # (S, H)
        "sin": jnp.tile(sin, (1, num_heads)),                    # (S, H)
        "rope_perm": rope_perm,
    }


# ----------------------------------- wrapper -------------------------------- #

def multi_head_attention(x, prep, *, num_heads, use_rope=True):
    """Forward pass of MultiHeadAttention (self-attention, no mask, no cache)."""
    B, S, H = x.shape
    hd = H // num_heads
    scale = hd ** (-0.5)
    kernel = functools.partial(_mha_fused_kernel, num_heads=num_heads,
                               scale=scale, use_rope=use_rope)

    def rep2d(shape):
        return pl.BlockSpec(shape, lambda b: (0, 0))

    return pl.pallas_call(
        kernel,
        out_shape=jax.ShapeDtypeStruct((B, S, H), x.dtype),
        grid=(B,),
        in_specs=[
            pl.BlockSpec((None, S, H), lambda b: (b, 0, 0)),     # x: one batch slab / step
            rep2d((H, H)), rep2d((H, H)), rep2d((H, H)), rep2d((H, H)),   # wq/wk/wv/wo (IN,OUT)
            rep2d((S, H)), rep2d((S, H)),                        # cos / sin (per-head tiled)
            rep2d((H, H)),                                       # rotate_half matrix
        ],
        out_specs=pl.BlockSpec((None, S, H), lambda b: (b, 0, 0)),
        compiler_params=pltpu.CompilerParams(
            dimension_semantics=("parallel",)),                  # v7x: shard batch on 2 TCs
    )(x, prep["wq_t"], prep["wk_t"], prep["wv_t"], prep["wo_t"],
      prep["cos"], prep["sin"], prep["rope_perm"])


# ------------------------------ pure-JAX reference --------------------------- #

def reference_mha(x, params, *, num_heads, use_rope=True):
    """Pure-JAX reference mirroring the PyTorch forward (eval, no mask)."""
    B, S, H = x.shape
    hd = H // num_heads

    def proj(t, w):
        return (t @ w.T).reshape(B, S, num_heads, hd).transpose(0, 2, 1, 3)

    q = proj(x, params["wq"])
    k = proj(x, params["wk"])
    v = proj(x, params["wv"])

    if use_rope:
        cos, sin = rope_tables(S, hd)

        def rot_half(t):
            t1, t2 = t[..., : hd // 2], t[..., hd // 2:]
            return jnp.concatenate([-t2, t1], axis=-1)

        q = q * cos + rot_half(q) * sin
        k = k * cos + rot_half(k) * sin

    scores = jnp.einsum("bhqd,bhkd->bhqk", q, k) * (hd ** -0.5)
    p = jax.nn.softmax(scores, axis=-1)
    o = jnp.einsum("bhqk,bhkd->bhqd", p, v)
    o = o.transpose(0, 2, 1, 3).reshape(B, S, H)
    return o @ params["wo"].T


# ----------------------------------- main ------------------------------------ #

if __name__ == "__main__":
    # TransformerConfig: hidden_size=32, num_heads=4, use_rotary=True, dropout=0.0
    B, S, H, NH = 2, 8, 32, 4

    key = jax.random.PRNGKey(0)
    kx, kq, kk, kv, ko = jax.random.split(key, 5)

    x = jax.random.normal(kx, (B, S, H), dtype=jnp.float32)
    params = {
        "wq": 0.05 * jax.random.normal(kq, (H, H), dtype=jnp.float32),
        "wk": 0.05 * jax.random.normal(kk, (H, H), dtype=jnp.float32),
        "wv": 0.05 * jax.random.normal(kv, (H, H), dtype=jnp.float32),
        "wo": 0.05 * jax.random.normal(ko, (H, H), dtype=jnp.float32),
    }

    prep = prepare_mha(params, num_heads=NH, seq_len=S)          # built once, reused
    out = multi_head_attention(x, prep, num_heads=NH, use_rope=True)
    out = jax.block_until_ready(out)

    ref = reference_mha(x, params, num_heads=NH, use_rope=True)
    assert out.shape == (B, S, H)
    # Tolerance slightly loosened vs exact softmax because the kernel uses the
    # EUP approximate reciprocal for the softmax denominator (per perf review).
    assert jnp.allclose(out, ref, rtol=1e-3, atol=1e-3), "mismatch vs reference"

    print("KERNEL_OK")
</pallas_src>

<mosaic_0001>
module attributes {stable_mosaic.version = 11 : i64} {
  func.func @_mha_fused_kernel(%arg0: i32, %arg1: memref<1x8x32xf32, #tpu.memory_space<vmem>>, %arg2: memref<32x32xf32, #tpu.memory_space<vmem>>, %arg3: memref<32x32xf32, #tpu.memory_space<vmem>>, %arg4: memref<32x32xf32, #tpu.memory_space<vmem>>, %arg5: memref<32x32xf32, #tpu.memory_space<vmem>>, %arg6: memref<8x32xf32, #tpu.memory_space<vmem>>, %arg7: memref<8x32xf32, #tpu.memory_space<vmem>>, %arg8: memref<32x32xf32, #tpu.memory_space<vmem>>, %arg9: memref<1x8x32xf32, #tpu.memory_space<vmem>>) attributes {dimension_semantics = [#tpu.dimension_semantics<parallel>], iteration_bounds = array<i64: 2>, scalar_prefetch = 0 : i64, scratch_operands = 0 : i64, tpu.core_type = #tpu.core_type<tc>, window_params = [{transform_indices = @transform_0, window_bounds = array<i64: 1, 8, 32>}, {pipeline_mode = #tpu.pipeline_mode<synchronous>, transform_indices = @transform_1, window_bounds = array<i64: 32, 32>}, {pipeline_mode = #tpu.pipeline_mode<synchronous>, transform_indices = @transform_2, window_bounds = array<i64: 32, 32>}, {pipeline_mode = #tpu.pipeline_mode<synchronous>, transform_indices = @transform_3, window_bounds = array<i64: 32, 32>}, {pipeline_mode = #tpu.pipeline_mode<synchronous>, transform_indices = @transform_4, window_bounds = array<i64: 32, 32>}, {pipeline_mode = #tpu.pipeline_mode<synchronous>, transform_indices = @transform_5, window_bounds = array<i64: 8, 32>}, {pipeline_mode = #tpu.pipeline_mode<synchronous>, transform_indices = @transform_6, window_bounds = array<i64: 8, 32>}, {pipeline_mode = #tpu.pipeline_mode<synchronous>, transform_indices = @transform_7, window_bounds = array<i64: 32, 32>}, {transform_indices = @transform_8, window_bounds = array<i64: 1, 8, 32>}]} {
    %c0 = arith.constant 0 : index
    %c0_0 = arith.constant 0 : index
    %c0_1 = arith.constant 0 : index
    %0 = vector.load %arg1[%c0, %c0_0, %c0_1] : memref<1x8x32xf32, #tpu.memory_space<vmem>>, vector<1x8x32xf32>
    %1 = vector.shape_cast %0 : vector<1x8x32xf32> to vector<8x32xf32>
    %c0_2 = arith.constant 0 : index
    %c0_3 = arith.constant 0 : index
    %2 = vector.load %arg2[%c0_2, %c0_3] : memref<32x32xf32, #tpu.memory_space<vmem>>, vector<32x32xf32>
    %cst = arith.constant dense<0.000000e+00> : vector<8x32xf32>
    %3 = tpu.matmul %1, %2, %cst {dimension_numbers = #tpu.dot_dimension_numbers<[1], [0], [0], [1], [0, 0, 1, 1], [], []>} : vector<8x32xf32>, vector<32x32xf32>, vector<8x32xf32> -> vector<8x32xf32>
    %c0_4 = arith.constant 0 : index
    %c0_5 = arith.constant 0 : index
    %4 = vector.load %arg3[%c0_4, %c0_5] : memref<32x32xf32, #tpu.memory_space<vmem>>, vector<32x32xf32>
    %cst_6 = arith.constant dense<0.000000e+00> : vector<8x32xf32>
    %5 = tpu.matmul %1, %4, %cst_6 {dimension_numbers = #tpu.dot_dimension_numbers<[1], [0], [0], [1], [0, 0, 1, 1], [], []>} : vector<8x32xf32>, vector<32x32xf32>, vector<8x32xf32> -> vector<8x32xf32>
    %c0_7 = arith.constant 0 : index
    %c0_8 = arith.constant 0 : index
    %6 = vector.load %arg4[%c0_7, %c0_8] : memref<32x32xf32, #tpu.memory_space<vmem>>, vector<32x32xf32>
    %cst_9 = arith.constant dense<0.000000e+00> : vector<8x32xf32>
    %7 = tpu.matmul %1, %6, %cst_9 {dimension_numbers = #tpu.dot_dimension_numbers<[1], [0], [0], [1], [0, 0, 1, 1], [], []>} : vector<8x32xf32>, vector<32x32xf32>, vector<8x32xf32> -> vector<8x32xf32>
    %c0_10 = arith.constant 0 : index
    %c0_11 = arith.constant 0 : index
    %8 = vector.load %arg6[%c0_10, %c0_11] : memref<8x32xf32, #tpu.memory_space<vmem>>, vector<8x32xf32>
    %c0_12 = arith.constant 0 : index
    %c0_13 = arith.constant 0 : index
    %9 = vector.load %arg7[%c0_12, %c0_13] : memref<8x32xf32, #tpu.memory_space<vmem>>, vector<8x32xf32>
    %c0_14 = arith.constant 0 : index
    %c0_15 = arith.constant 0 : index
    %10 = vector.load %arg8[%c0_14, %c0_15] : memref<32x32xf32, #tpu.memory_space<vmem>>, vector<32x32xf32>
    %11 = arith.mulf %3, %8 : vector<8x32xf32>
    %cst_16 = arith.constant dense<0.000000e+00> : vector<8x32xf32>
    %12 = tpu.matmul %3, %10, %cst_16 {dimension_numbers = #tpu.dot_dimension_numbers<[1], [0], [0], [1], [0, 0, 1, 1], [], []>} : vector<8x32xf32>, vector<32x32xf32>, vector<8x32xf32> -> vector<8x32xf32>
    %13 = arith.mulf %12, %9 : vector<8x32xf32>
    %14 = arith.addf %11, %13 : vector<8x32xf32>
    %15 = arith.mulf %5, %8 : vector<8x32xf32>
    %cst_17 = arith.constant dense<0.000000e+00> : vector<8x32xf32>
    %16 = tpu.matmul %5, %10, %cst_17 {dimension_numbers = #tpu.dot_dimension_numbers<[1], [0], [0], [1], [0, 0, 1, 1], [], []>} : vector<8x32xf32>, vector<32x32xf32>, vector<8x32xf32> -> vector<8x32xf32>
    %17 = arith.mulf %16, %9 : vector<8x32xf32>
    %18 = arith.addf %15, %17 : vector<8x32xf32>
    %cst_18 = arith.constant 0.353553385 : f32
    %19 = vector.broadcast %cst_18 : f32 to vector<8x32xf32>
    %20 = arith.mulf %14, %19 : vector<8x32xf32>
    %21 = vector.extract_strided_slice %20 {offsets = [0, 0], sizes = [8, 8], strides = [1, 1]} : vector<8x32xf32> to vector<8x8xf32>
    %22 = vector.extract_strided_slice %18 {offsets = [0, 0], sizes = [8, 8], strides = [1, 1]} : vector<8x32xf32> to vector<8x8xf32>
    %23 = vector.extract_strided_slice %7 {offsets = [0, 0], sizes = [8, 8], strides = [1, 1]} : vector<8x32xf32> to vector<8x8xf32>
    %cst_19 = arith.constant dense<0.000000e+00> : vector<8x8xf32>
    %24 = tpu.matmul %21, %22, %cst_19 {dimension_numbers = #tpu.dot_dimension_numbers<[1], [1], [0], [0], [0, 0, 1, 0], [], []>} : vector<8x8xf32>, vector<8x8xf32>, vector<8x8xf32> -> vector<8x8xf32>
    %cst_20 = arith.constant dense<0xFF800000> : vector<8xf32>
    %25 = vector.multi_reduction <maximumf>, %24, %cst_20 [1] : vector<8x8xf32> to vector<8xf32>
    %26 = vector.shape_cast %25 : vector<8xf32> to vector<8x1xf32>
    %27 = vector.broadcast %26 : vector<8x1xf32> to vector<8x8xf32>
    %28 = arith.subf %24, %27 : vector<8x8xf32>
    %29 = math.exp %28 : vector<8x8xf32>
    %cst_21 = arith.constant dense<0.000000e+00> : vector<8xf32>
    %30 = vector.multi_reduction <add>, %29, %cst_21 [1] : vector<8x8xf32> to vector<8xf32>
    %31 = vector.shape_cast %30 : vector<8xf32> to vector<8x1xf32>
    %32 = tpu.reciprocal %31 {approx = true} : vector<8x1xf32> -> vector<8x1xf32>
    %33 = vector.broadcast %32 : vector<8x1xf32> to vector<8x8xf32>
    %34 = arith.mulf %29, %33 : vector<8x8xf32>
    %cst_22 = arith.constant dense<0.000000e+00> : vector<8x8xf32>
    %35 = tpu.matmul %34, %23, %cst_22 {dimension_numbers = #tpu.dot_dimension_numbers<[1], [0], [0], [1], [0, 0, 1, 1], [], []>} : vector<8x8xf32>, vector<8x8xf32>, vector<8x8xf32> -> vector<8x8xf32>
    %36 = vector.extract_strided_slice %20 {offsets = [0, 8], sizes = [8, 8], strides = [1, 1]} : vector<8x32xf32> to vector<8x8xf32>
    %37 = vector.extract_strided_slice %18 {offsets = [0, 8], sizes = [8, 8], strides = [1, 1]} : vector<8x32xf32> to vector<8x8xf32>
    %38 = vector.extract_strided_slice %7 {offsets = [0, 8], sizes = [8, 8], strides = [1, 1]} : vector<8x32xf32> to vector<8x8xf32>
    %cst_23 = arith.constant dense<0.000000e+00> : vector<8x8xf32>
    %39 = tpu.matmul %36, %37, %cst_23 {dimension_numbers = #tpu.dot_dimension_numbers<[1], [1], [0], [0], [0, 0, 1, 0], [], []>} : vector<8x8xf32>, vector<8x8xf32>, vector<8x8xf32> -> vector<8x8xf32>
    %cst_24 = arith.constant dense<0xFF800000> : vector<8xf32>
    %40 = vector.multi_reduction <maximumf>, %39, %cst_24 [1] : vector<8x8xf32> to vector<8xf32>
    %41 = vector.shape_cast %40 : vector<8xf32> to vector<8x1xf32>
    %42 = vector.broadcast %41 : vector<8x1xf32> to vector<8x8xf32>
    %43 = arith.subf %39, %42 : vector<8x8xf32>
    %44 = math.exp %43 : vector<8x8xf32>
    %cst_25 = arith.constant dense<0.000000e+00> : vector<8xf32>
    %45 = vector.multi_reduction <add>, %44, %cst_25 [1] : vector<8x8xf32> to vector<8xf32>
    %46 = vector.shape_cast %45 : vector<8xf32> to vector<8x1xf32>
    %47 = tpu.reciprocal %46 {approx = true} : vector<8x1xf32> -> vector<8x1xf32>
    %48 = vector.broadcast %47 : vector<8x1xf32> to vector<8x8xf32>
    %49 = arith.mulf %44, %48 : vector<8x8xf32>
    %cst_26 = arith.constant dense<0.000000e+00> : vector<8x8xf32>
    %50 = tpu.matmul %49, %38, %cst_26 {dimension_numbers = #tpu.dot_dimension_numbers<[1], [0], [0], [1], [0, 0, 1, 1], [], []>} : vector<8x8xf32>, vector<8x8xf32>, vector<8x8xf32> -> vector<8x8xf32>
    %51 = vector.extract_strided_slice %20 {offsets = [0, 16], sizes = [8, 8], strides = [1, 1]} : vector<8x32xf32> to vector<8x8xf32>
    %52 = vector.extract_strided_slice %18 {offsets = [0, 16], sizes = [8, 8], strides = [1, 1]} : vector<8x32xf32> to vector<8x8xf32>
    %53 = vector.extract_strided_slice %7 {offsets = [0, 16], sizes = [8, 8], strides = [1, 1]} : vector<8x32xf32> to vector<8x8xf32>
    %cst_27 = arith.constant dense<0.000000e+00> : vector<8x8xf32>
    %54 = tpu.matmul %51, %52, %cst_27 {dimension_numbers = #tpu.dot_dimension_numbers<[1], [1], [0], [0], [0, 0, 1, 0], [], []>} : vector<8x8xf32>, vector<8x8xf32>, vector<8x8xf32> -> vector<8x8xf32>
    %cst_28 = arith.constant dense<0xFF800000> : vector<8xf32>
    %55 = vector.multi_reduction <maximumf>, %54, %cst_28 [1] : vector<8x8xf32> to vector<8xf32>
    %56 = vector.shape_cast %55 : vector<8xf32> to vector<8x1xf32>
    %57 = vector.broadcast %56 : vector<8x1xf32> to vector<8x8xf32>
    %58 = arith.subf %54, %57 : vector<8x8xf32>
    %59 = math.exp %58 : vector<8x8xf32>
    %cst_29 = arith.constant dense<0.000000e+00> : vector<8xf32>
    %60 = vector.multi_reduction <add>, %59, %cst_29 [1] : vector<8x8xf32> to vector<8xf32>
    %61 = vector.shape_cast %60 : vector<8xf32> to vector<8x1xf32>
    %62 = tpu.reciprocal %61 {approx = true} : vector<8x1xf32> -> vector<8x1xf32>
    %63 = vector.broadcast %62 : vector<8x1xf32> to vector<8x8xf32>
    %64 = arith.mulf %59, %63 : vector<8x8xf32>
    %cst_30 = arith.constant dense<0.000000e+00> : vector<8x8xf32>
    %65 = tpu.matmul %64, %53, %cst_30 {dimension_numbers = #tpu.dot_dimension_numbers<[1], [0], [0], [1], [0, 0, 1, 1], [], []>} : vector<8x8xf32>, vector<8x8xf32>, vector<8x8xf32> -> vector<8x8xf32>
    %66 = vector.extract_strided_slice %20 {offsets = [0, 24], sizes = [8, 8], strides = [1, 1]} : vector<8x32xf32> to vector<8x8xf32>
    %67 = vector.extract_strided_slice %18 {offsets = [0, 24], sizes = [8, 8], strides = [1, 1]} : vector<8x32xf32> to vector<8x8xf32>
    %68 = vector.extract_strided_slice %7 {offsets = [0, 24], sizes = [8, 8], strides = [1, 1]} : vector<8x32xf32> to vector<8x8xf32>
    %cst_31 = arith.constant dense<0.000000e+00> : vector<8x8xf32>
    %69 = tpu.matmul %66, %67, %cst_31 {dimension_numbers = #tpu.dot_dimension_numbers<[1], [1], [0], [0], [0, 0, 1, 0], [], []>} : vector<8x8xf32>, vector<8x8xf32>, vector<8x8xf32> -> vector<8x8xf32>
    %cst_32 = arith.constant dense<0xFF800000> : vector<8xf32>
    %70 = vector.multi_reduction <maximumf>, %69, %cst_32 [1] : vector<8x8xf32> to vector<8xf32>
    %71 = vector.shape_cast %70 : vector<8xf32> to vector<8x1xf32>
    %72 = vector.broadcast %71 : vector<8x1xf32> to vector<8x8xf32>
    %73 = arith.subf %69, %72 : vector<8x8xf32>
    %74 = math.exp %73 : vector<8x8xf32>
    %cst_33 = arith.constant dense<0.000000e+00> : vector<8xf32>
    %75 = vector.multi_reduction <add>, %74, %cst_33 [1] : vector<8x8xf32> to vector<8xf32>
    %76 = vector.shape_cast %75 : vector<8xf32> to vector<8x1xf32>
    %77 = tpu.reciprocal %76 {approx = true} : vector<8x1xf32> -> vector<8x1xf32>
    %78 = vector.broadcast %77 : vector<8x1xf32> to vector<8x8xf32>
    %79 = arith.mulf %74, %78 : vector<8x8xf32>
    %cst_34 = arith.constant dense<0.000000e+00> : vector<8x8xf32>
    %80 = tpu.matmul %79, %68, %cst_34 {dimension_numbers = #tpu.dot_dimension_numbers<[1], [0], [0], [1], [0, 0, 1, 1], [], []>} : vector<8x8xf32>, vector<8x8xf32>, vector<8x8xf32> -> vector<8x8xf32>
    %81 = tpu.concatenate %35, %50, %65, %80 in 1 : vector<8x8xf32>, vector<8x8xf32>, vector<8x8xf32>, vector<8x8xf32> -> vector<8x32xf32>
    %c0_35 = arith.constant 0 : index
    %c0_36 = arith.constant 0 : index
    %82 = vector.load %arg5[%c0_35, %c0_36] : memref<32x32xf32, #tpu.memory_space<vmem>>, vector<32x32xf32>
    %cst_37 = arith.constant dense<0.000000e+00> : vector<8x32xf32>
    %83 = tpu.matmul %81, %82, %cst_37 {dimension_numbers = #tpu.dot_dimension_numbers<[1], [0], [0], [1], [0, 0, 1, 1], [], []>} : vector<8x32xf32>, vector<32x32xf32>, vector<8x32xf32> -> vector<8x32xf32>
    %c0_38 = arith.constant 0 : index
    %c0_39 = arith.constant 0 : index
    %c0_40 = arith.constant 0 : index
    %84 = vector.load %arg9[%c0_38, %c0_39, %c0_40] : memref<1x8x32xf32, #tpu.memory_space<vmem>>, vector<1x8x32xf32>
    %85 = vector.shape_cast %84 : vector<1x8x32xf32> to vector<8x32xf32>
    %86 = vector.shape_cast %83 : vector<8x32xf32> to vector<1x8x32xf32>
    tpu.vector_store %arg9[%c0_38, %c0_39, %c0_40], %86 {strides = array<i32>} : memref<1x8x32xf32, #tpu.memory_space<vmem>>, vector<1x8x32xf32>,
    return
  }
  func.func @transform_0(%arg0: i32) -> (i32, i32, i32) {
    %c0_i32 = arith.constant 0 : i32
    %c0_i32_0 = arith.constant 0 : i32
    %c0_i32_1 = arith.constant 0 : i32
    return %arg0, %c0_i32, %c0_i32_0 : i32, i32, i32
  }
  func.func @transform_1(%arg0: i32) -> (i32, i32) {
    %c0_i32 = arith.constant 0 : i32
    %c0_i32_0 = arith.constant 0 : i32
    %c0_i32_1 = arith.constant 0 : i32
    return %c0_i32, %c0_i32_0 : i32, i32
  }
  func.func @transform_2(%arg0: i32) -> (i32, i32) {
    %c0_i32 = arith.constant 0 : i32
    %c0_i32_0 = arith.constant 0 : i32
    %c0_i32_1 = arith.constant 0 : i32
    return %c0_i32, %c0_i32_0 : i32, i32
  }
  func.func @transform_3(%arg0: i32) -> (i32, i32) {
    %c0_i32 = arith.constant 0 : i32
    %c0_i32_0 = arith.constant 0 : i32
    %c0_i32_1 = arith.constant 0 : i32
    return %c0_i32, %c0_i32_0 : i32, i32
  }
  func.func @transform_4(%arg0: i32) -> (i32, i32) {
    %c0_i32 = arith.constant 0 : i32
    %c0_i32_0 = arith.constant 0 : i32
    %c0_i32_1 = arith.constant 0 : i32
    return %c0_i32, %c0_i32_0 : i32, i32
  }
  func.func @transform_5(%arg0: i32) -> (i32, i32) {
    %c0_i32 = arith.constant 0 : i32
    %c0_i32_0 = arith.constant 0 : i32
    %c0_i32_1 = arith.constant 0 : i32
    return %c0_i32, %c0_i32_0 : i32, i32
  }
  func.func @transform_6(%arg0: i32) -> (i32, i32) {
    %c0_i32 = arith.constant 0 : i32
    %c0_i32_0 = arith.constant 0 : i32
    %c0_i32_1 = arith.constant 0 : i32
    return %c0_i32, %c0_i32_0 : i32, i32
  }
  func.func @transform_7(%arg0: i32) -> (i32, i32) {
    %c0_i32 = arith.constant 0 : i32
    %c0_i32_0 = arith.constant 0 : i32
    %c0_i32_1 = arith.constant 0 : i32
    return %c0_i32, %c0_i32_0 : i32, i32
  }
  func.func @transform_8(%arg0: i32) -> (i32, i32, i32) {
    %c0_i32 = arith.constant 0 : i32
    %c0_i32_0 = arith.constant 0 : i32
    %c0_i32_1 = arith.constant 0 : i32
    return %arg0, %c0_i32, %c0_i32_0 : i32, i32, i32
  }
}

</mosaic_0001>

<llo_original>
// kernel: tpu_custom_call.1
$region0: #{tpu_custom_call.1}
  #allocation0 [shape = 'u32[]', space=smem, size = 0x4, offset = 0x4, fixed_abs, tag = 'smem constant byte address 0x4 - core index']
  #allocation1 [shape = 'u32[144,128]{1,0:T(1,128)}', space=vmem, size = 0x12000, scoped, tag = 'internal scratch']
  %s0 = inlined_call_operand.hbm [shape: f32[2,8,32], index: 0, kind: input, shape index: {}]
  %s1 = inlined_call_operand.hbm [shape: f32[32,32], index: 1, kind: input, shape index: {}]
  %s2 = inlined_call_operand.hbm [shape: f32[32,32], index: 2, kind: input, shape index: {}]
  %s3 = inlined_call_operand.hbm [shape: f32[32,32], index: 3, kind: input, shape index: {}]
  %s4 = inlined_call_operand.hbm [shape: f32[32,32], index: 4, kind: input, shape index: {}]
  %s5 = inlined_call_operand.vmem [shape: f32[8,32], index: 5, kind: input, shape index: {}]
  %s6 = inlined_call_operand.vmem [shape: f32[8,32], index: 6, kind: input, shape index: {}]
  %s7 = inlined_call_operand.hbm [shape: f32[32,32], index: 7, kind: input, shape index: {}]
  %s8 = inlined_call_operand.hbm [shape: f32[2,8,32], index: 8, kind: output, shape index: {}]
  %s9 = sld [smem:[#allocation0]]
  $region89: #{tpu_custom_call.1} parent=0
    _
  %s11 = ssub.s32 1, %s9
  %s12 = scalar_select 0, %s11, %s9
  $region1: #{tpu_custom_call.1} parent=0
    #allocation2 [shape = 'u8[8192]{0}', space=vmem, size = 0x2000, scoped, tag = 'input window, operand 0']
    #allocation3 [shape = 's32[2]{0}', space=sflag, size = 0x8, scoped, tag = 'scoped memory for tpu_custom_call.1']
    #allocation4 [shape = 's32[2]{0}', space=sflag, size = 0x8, scoped, tag = 'scoped memory for tpu_custom_call.1']
    #allocation5 [shape = 'u8[16384]{0}', space=vmem, size = 0x4000, scoped, tag = 'input window, operand 1, single buffered']
    #allocation6 [shape = 's32[1]{0}', space=sflag, size = 0x4, scoped, tag = 'scoped memory for tpu_custom_call.1']
    #allocation7 [shape = 'u8[16384]{0}', space=vmem, size = 0x4000, scoped, tag = 'input window, operand 2, single buffered']
    #allocation8 [shape = 'u8[16384]{0}', space=vmem, size = 0x4000, scoped, tag = 'input window, operand 3, single buffered']
    #allocation9 [shape = 's32[1]{0}', space=sflag, size = 0x4, scoped, tag = 'scoped memory for tpu_custom_call.1']
    #allocation10 [shape = 'u8[16384]{0}', space=vmem, size = 0x4000, scoped, tag = 'input window, operand 4, single buffered']
    #allocation11 [shape = 'u8[16384]{0}', space=vmem, size = 0x4000, scoped, tag = 'input window, operand 7, single buffered']
    #allocation12 [shape = 's32[1]{0}', space=sflag, size = 0x4, scoped, tag = 'scoped memory for tpu_custom_call.1']
    #allocation13 [shape = 'u8[8192]{0}', space=vmem, size = 0x2000, scoped, tag = 'output window, operand 0']
    %13 = vsyncpa [#allocation3], 0
    %s14 = scalar_lea.sflag [#allocation3], 1
    %15 = vsyncpa %s14, 0
    %16 = vsyncpa [#allocation6], 0
    %17 = vsyncpa [#allocation9], 0
    %18 = vsyncpa [#allocation12], 0
    %19 = vsyncpa [#allocation4], 0
    %s20 = scalar_lea.sflag [#allocation4], 1
    %21 = vsyncpa %s20, 0
    loop: start=0, step=1, limit=4
    $region2: #{tpu_custom_call.1} parent=1 // loop_pre_header
      _
    $region3: #{tpu_custom_call.1} parent=1 // loop_header
      %s23 = sphi 0, %s27
      %p24 = scmp.ge.s32.totalorder %s23, 4
      %s33 = sphi 0, %s35
      %s36 = sphi 0, %s33
      %s37 = sphi 0, %s36
      %s53 = sphi 0, %s37
      %s57 = sphi 0, %s57
      %s59 = sphi 0, %s57
      %s60 = sphi 0, %s59
      %s74 = sphi 0, %s60
      %s78 = sphi 0, %s78
      %s80 = sphi 0, %s78
      %s81 = sphi 0, %s80
      %s95 = sphi 0, %s81
      %s99 = sphi 0, %s99
      %s101 = sphi 0, %s99
      %s102 = sphi 0, %s101
      %s116 = sphi 0, %s102
      %s120 = sphi 0, %s120
      %s122 = sphi 0, %s120
      %s123 = sphi 0, %s122
      %s137 = sphi 0, %s123
      %s141 = sphi 0, %s141
      %s143 = sphi 0, %s141
      %s144 = sphi 0, %s143
      %s158 = sphi 0, %s144
      %s162 = sphi 0, %s162
      %s164 = sphi 0, %s162
      %s165 = sphi 0, %s164
      %s179 = sphi 0, %s165
      %s183 = sphi 0, %s183
      %s185 = sphi 0, %s183
      %s186 = sphi 0, %s185
      %s200 = sphi 0, %s186
      %s206 = sphi 0, %s208
      %s209 = sphi 0, %s206
      %s210 = sphi 0, %s209
      %s226 = sphi 0, %s210
    $region4: #{tpu_custom_call.1} parent=1 // loop_header_branch
      %26 = sbr.rel (%p24) target = $region8
    $region5: #{tpu_custom_call.1} parent=1 // loop_body
      %s28 = ssub.s32 %s23, 1
      %s29 = ssub.s32 %s23, 2
      %s30 = sadd.s32 %s23, 1
      %s31 = ssub.s32 %s23, %s30
      %p32 = scmp.eq.s32.totalorder %s31, 0
      %s34 = sadd.s32 %s33, 1
      %s35 = scalar_select %p32, %s33, %s34
      %p38 = pneg %p32
      %p39 = scmp.eq.s32.totalorder %s23, 1
      %p40 = por %p38, %p39
      %p41 = scmp.ne.s32.totalorder %s33, %s36
      %p42 = scmp.eq.s32.totalorder %s23, 0
      %p43 = por %p41, %p42
      %p44 = scmp.ne.s32.totalorder %s33, %s36
      %p45 = scmp.eq.s32.totalorder %s28, 1
      %p46 = por %p44, %p45
      %p47 = scmp.ne.s32.totalorder %s36, %s37
      %p48 = scmp.eq.s32.totalorder %s28, 0
      %p49 = por %p47, %p48
      %p50 = scmp.ne.s32.totalorder %s36, %s37
      %p51 = scmp.eq.s32.totalorder %s29, 1
      %p52 = por %p50, %p51
      %p54 = scmp.ne.s32.totalorder %s37, %s53
      %p55 = scmp.eq.s32.totalorder %s29, 0
      %p56 = por %p54, %p55
      %s58 = sadd.s32 %s57, 1
      %p61 = scmp.eq.s32.totalorder %s23, 1
      %p62 = scmp.ne.s32.totalorder %s57, %s59
      %p63 = scmp.eq.s32.totalorder %s23, 0
      %p64 = por %p62, %p63
      %p65 = scmp.ne.s32.totalorder %s57, %s59
      %p66 = scmp.eq.s32.totalorder %s28, 1
      %p67 = por %p65, %p66
      %p68 = scmp.ne.s32.totalorder %s59, %s60
      %p69 = scmp.eq.s32.totalorder %s28, 0
      %p70 = por %p68, %p69
      %p71 = scmp.ne.s32.totalorder %s59, %s60
      %p72 = scmp.eq.s32.totalorder %s29, 1
      %p73 = por %p71, %p72
      %p75 = scmp.ne.s32.totalorder %s60, %s74
      %p76 = scmp.eq.s32.totalorder %s29, 0
      %p77 = por %p75, %p76
      %s79 = sadd.s32 %s78, 1
      %p82 = scmp.eq.s32.totalorder %s23, 1
      %p83 = scmp.ne.s32.totalorder %s78, %s80
      %p84 = scmp.eq.s32.totalorder %s23, 0
      %p85 = por %p83, %p84
      %p86 = scmp.ne.s32.totalorder %s78, %s80
      %p87 = scmp.eq.s32.totalorder %s28, 1
      %p88 = por %p86, %p87
      %p89 = scmp.ne.s32.totalorder %s80, %s81
      %p90 = scmp.eq.s32.totalorder %s28, 0
      %p91 = por %p89, %p90
      %p92 = scmp.ne.s32.totalorder %s80, %s81
      %p93 = scmp.eq.s32.totalorder %s29, 1
      %p94 = por %p92, %p93
      %p96 = scmp.ne.s32.totalorder %s81, %s95
      %p97 = scmp.eq.s32.totalorder %s29, 0
      %p98 = por %p96, %p97
      %s100 = sadd.s32 %s99, 1
      %p103 = scmp.eq.s32.totalorder %s23, 1
      %p104 = scmp.ne.s32.totalorder %s99, %s101
      %p105 = scmp.eq.s32.totalorder %s23, 0
      %p106 = por %p104, %p105
      %p107 = scmp.ne.s32.totalorder %s99, %s101
      %p108 = scmp.eq.s32.totalorder %s28, 1
      %p109 = por %p107, %p108
      %p110 = scmp.ne.s32.totalorder %s101, %s102
      %p111 = scmp.eq.s32.totalorder %s28, 0
      %p112 = por %p110, %p111
      %p113 = scmp.ne.s32.totalorder %s101, %s102
      %p114 = scmp.eq.s32.totalorder %s29, 1
      %p115 = por %p113, %p114
      %p117 = scmp.ne.s32.totalorder %s102, %s116
      %p118 = scmp.eq.s32.totalorder %s29, 0
      %p119 = por %p117, %p118
      %s121 = sadd.s32 %s120, 1
      %p124 = scmp.eq.s32.totalorder %s23, 1
      %p125 = scmp.ne.s32.totalorder %s120, %s122
      %p126 = scmp.eq.s32.totalorder %s23, 0
      %p127 = por %p125, %p126
      %p128 = scmp.ne.s32.totalorder %s120, %s122
      %p129 = scmp.eq.s32.totalorder %s28, 1
      %p130 = por %p128, %p129
      %p131 = scmp.ne.s32.totalorder %s122, %s123
      %p132 = scmp.eq.s32.totalorder %s28, 0
      %p133 = por %p131, %p132
      %p134 = scmp.ne.s32.totalorder %s122, %s123
      %p135 = scmp.eq.s32.totalorder %s29, 1
      %p136 = por %p134, %p135
      %p138 = scmp.ne.s32.totalorder %s123, %s137
      %p139 = scmp.eq.s32.totalorder %s29, 0
      %p140 = por %p138, %p139
      %s142 = sadd.s32 %s141, 1
      %p145 = scmp.eq.s32.totalorder %s23, 1
      %p146 = scmp.ne.s32.totalorder %s141, %s143
      %p147 = scmp.eq.s32.totalorder %s23, 0
      %p148 = por %p146, %p147
      %p149 = scmp.ne.s32.totalorder %s141, %s143
      %p150 = scmp.eq.s32.totalorder %s28, 1
      %p151 = por %p149, %p150
      %p152 = scmp.ne.s32.totalorder %s143, %s144
      %p153 = scmp.eq.s32.totalorder %s28, 0
      %p154 = por %p152, %p153
      %p155 = scmp.ne.s32.totalorder %s143, %s144
      %p156 = scmp.eq.s32.totalorder %s29, 1
      %p157 = por %p155, %p156
      %p159 = scmp.ne.s32.totalorder %s144, %s158
      %p160 = scmp.eq.s32.totalorder %s29, 0
      %p161 = por %p159, %p160
      %s163 = sadd.s32 %s162, 1
      %p166 = scmp.eq.s32.totalorder %s23, 1
      %p167 = scmp.ne.s32.totalorder %s162, %s164
      %p168 = scmp.eq.s32.totalorder %s23, 0
      %p169 = por %p167, %p168
      %p170 = scmp.ne.s32.totalorder %s162, %s164
      %p171 = scmp.eq.s32.totalorder %s28, 1
      %p172 = por %p170, %p171
      %p173 = scmp.ne.s32.totalorder %s164, %s165
      %p174 = scmp.eq.s32.totalorder %s28, 0
      %p175 = por %p173, %p174
      %p176 = scmp.ne.s32.totalorder %s164, %s165
      %p177 = scmp.eq.s32.totalorder %s29, 1
      %p178 = por %p176, %p177
      %p180 = scmp.ne.s32.totalorder %s165, %s179
      %p181 = scmp.eq.s32.totalorder %s29, 0
      %p182 = por %p180, %p181
      %s184 = sadd.s32 %s183, 1
      %p187 = scmp.eq.s32.totalorder %s23, 1
      %p188 = scmp.ne.s32.totalorder %s183, %s185
      %p189 = scmp.eq.s32.totalorder %s23, 0
      %p190 = por %p188, %p189
      %p191 = scmp.ne.s32.totalorder %s183, %s185
      %p192 = scmp.eq.s32.totalorder %s28, 1
      %p193 = por %p191, %p192
      %p194 = scmp.ne.s32.totalorder %s185, %s186
      %p195 = scmp.eq.s32.totalorder %s28, 0
      %p196 = por %p194, %p195
      %p197 = scmp.ne.s32.totalorder %s185, %s186
      %p198 = scmp.eq.s32.totalorder %s29, 1
      %p199 = por %p197, %p198
      %p201 = scmp.ne.s32.totalorder %s186, %s200
      %p202 = scmp.eq.s32.totalorder %s29, 0
      %p203 = por %p201, %p202
      %s204 = ssub.s32 %s23, %s30
      %p205 = scmp.eq.s32.totalorder %s204, 0
      %s207 = sadd.s32 %s206, 1
      %s208 = scalar_select %p205, %s206, %s207
      %p211 = pneg %p205
      %p212 = scmp.eq.s32.totalorder %s23, 1
      %p213 = por %p211, %p212
      %p214 = scmp.ne.s32.totalorder %s206, %s209
      %p215 = scmp.eq.s32.totalorder %s23, 0
      %p216 = por %p214, %p215
      %p217 = scmp.ne.s32.totalorder %s206, %s209
      %p218 = scmp.eq.s32.totalorder %s28, 1
      %p219 = por %p217, %p218
      %p220 = scmp.ne.s32.totalorder %s209, %s210
      %p221 = scmp.eq.s32.totalorder %s28, 0
      %p222 = por %p220, %p221
      %p223 = scmp.ne.s32.totalorder %s209, %s210
      %p224 = scmp.eq.s32.totalorder %s29, 1
      %p225 = por %p223, %p224
      %p227 = scmp.ne.s32.totalorder %s210, %s226
      %p228 = scmp.eq.s32.totalorder %s29, 0
      %p229 = por %p227, %p228
      %p230 = scmp.le.s32.totalorder 1, %s23
      %p231 = scmp.lt.s32.totalorder %s23, 3
      %p232 = pnand %p230, %p231
      %p233 = pneg %p232
      // Predicated region
      $region9: #{tpu_custom_call.1} parent=5 // pred_check
        _
      $region10: #{tpu_custom_call.1} parent=5 // pred_check_branch
        %235 = sbr.rel (%p232) target = $region12
      $region11: #{tpu_custom_call.1} parent=5 // pred_region
        %s236 = ssub.s32 %s23, 1
        // Predicated region
        $region13: #{tpu_custom_call.1} parent=11 // pred_check
          %p237 = pneg %p70
        $region14: #{tpu_custom_call.1} parent=11 // pred_check_branch
          %239 = sbr.rel (%p237) target = $region16
        $region15: #{tpu_custom_call.1} parent=11 // pred_region
          %s241 = ssub.s32 512, 512
          %242 = vsyncadd [#allocation6], %s241
          %s243 = sshll.u32 [#allocation5], 4
          %s244 = int_to_ptr.vmem [resolvable:$true] %s243
          %249 = dma.hbm_to_vmem [thread:$0]  %s1, 512, %s244, [#allocation6], 128, 128, 8
        $region16: #{tpu_custom_call.1} parent=11 // pred_fallthru
          _
        // Predicated region
        $region17: #{tpu_custom_call.1} parent=11 // pred_check
          %p250 = pneg %p91
        $region18: #{tpu_custom_call.1} parent=11 // pred_check_branch
          %252 = sbr.rel (%p250) target = $region20
        $region19: #{tpu_custom_call.1} parent=11 // pred_region
          %s254 = ssub.s32 512, 512
          %255 = vsyncadd [#allocation6], %s254
          %s256 = sshll.u32 [#allocation7], 4
          %s257 = int_to_ptr.vmem [resolvable:$true] %s256
          %262 = dma.hbm_to_vmem [thread:$0]  %s2, 512, %s257, [#allocation6], 128, 128, 8
        $region20: #{tpu_custom_call.1} parent=11 // pred_fallthru
          _
        // Predicated region
        $region21: #{tpu_custom_call.1} parent=11 // pred_check
          %p263 = pneg %p112
        $region22: #{tpu_custom_call.1} parent=11 // pred_check_branch
          %265 = sbr.rel (%p263) target = $region24
        $region23: #{tpu_custom_call.1} parent=11 // pred_region
          %s267 = ssub.s32 512, 512
          %268 = vsyncadd [#allocation9], %s267
          %s269 = sshll.u32 [#allocation8], 4
          %s270 = int_to_ptr.vmem [resolvable:$true] %s269
          %275 = dma.hbm_to_vmem [thread:$0]  %s3, 512, %s270, [#allocation9], 128, 128, 8
        $region24: #{tpu_custom_call.1} parent=11 // pred_fallthru
          _
        // Predicated region
        $region25: #{tpu_custom_call.1} parent=11 // pred_check
          %p276 = pneg %p133
        $region26: #{tpu_custom_call.1} parent=11 // pred_check_branch
          %278 = sbr.rel (%p276) target = $region28
        $region27: #{tpu_custom_call.1} parent=11 // pred_region
          %s280 = ssub.s32 512, 512
          %281 = vsyncadd [#allocation9], %s280
          %s282 = sshll.u32 [#allocation10], 4
          %s283 = int_to_ptr.vmem [resolvable:$true] %s282
          %288 = dma.hbm_to_vmem [thread:$0]  %s4, 512, %s283, [#allocation9], 128, 128, 8
        $region28: #{tpu_custom_call.1} parent=11 // pred_fallthru
          _
        // Predicated region
        $region29: #{tpu_custom_call.1} parent=11 // pred_check
          %p289 = pneg %p154
        $region30: #{tpu_custom_call.1} parent=11 // pred_check_branch
          %291 = sbr.rel (%p289) target = $region32
        $region31: #{tpu_custom_call.1} parent=11 // pred_region
          _
        $region32: #{tpu_custom_call.1} parent=11 // pred_fallthru
          _
        // Predicated region
        $region33: #{tpu_custom_call.1} parent=11 // pred_check
          %p292 = pneg %p175
        $region34: #{tpu_custom_call.1} parent=11 // pred_check_branch
          %294 = sbr.rel (%p292) target = $region36
        $region35: #{tpu_custom_call.1} parent=11 // pred_region
          _
        $region36: #{tpu_custom_call.1} parent=11 // pred_fallthru
          _
        // Predicated region
        $region37: #{tpu_custom_call.1} parent=11 // pred_check
          %p295 = pneg %p196
        $region38: #{tpu_custom_call.1} parent=11 // pred_check_branch
          %297 = sbr.rel (%p295) target = $region40
        $region39: #{tpu_custom_call.1} parent=11 // pred_region
          %s299 = ssub.s32 512, 512
          %300 = vsyncadd [#allocation12], %s299
          %s301 = sshll.u32 [#allocation11], 4
          %s302 = int_to_ptr.vmem [resolvable:$true] %s301
          %307 = dma.hbm_to_vmem [thread:$0]  %s7, 512, %s302, [#allocation12], 128, 128, 8
        $region40: #{tpu_custom_call.1} parent=11 // pred_fallthru
          _
      $region12: #{tpu_custom_call.1} parent=5 // pred_fallthru
        _
      %p308 = scmp.lt.s32.totalorder %s23, 2
      // Predicated region
      $region41: #{tpu_custom_call.1} parent=5 // pred_check
        %p309 = pneg %p308
      $region42: #{tpu_custom_call.1} parent=5 // pred_check_branch
        %311 = sbr.rel (%p309) target = $region44
      $region43: #{tpu_custom_call.1} parent=5 // pred_region
        // Predicated region
        $region45: #{tpu_custom_call.1} parent=43 // pred_check
          %p312 = pneg %p43
        $region46: #{tpu_custom_call.1} parent=43 // pred_check_branch
          %314 = sbr.rel (%p312) target = $region48
        $region47: #{tpu_custom_call.1} parent=43 // pred_region
          %s315 = sand.u32 %s33, 1
          %s316 = scalar_lea.sflag [#allocation3], %s315
          %s317 = sand.u32 %s33, 1
          %s318 = smul.addr %s317, 8
          %s319 = scalar_lea.vmem [#allocation2], %s318
          %s321 = ssub.s32 128, 128
          %322 = vsyncadd %s316, %s321
          %s323 = smul.addr %s23, 128
          %s324 = scalar_lea.hbm %s0, %s323
          %s326 = sshll.u32 %s319, 4
          %s327 = int_to_ptr.vmem [resolvable:$true] %s326
          %329 = dma.hbm_to_vmem [thread:$0]  %s324, 128, %s327, %s316
        $region48: #{tpu_custom_call.1} parent=43 // pred_fallthru
          _
      $region44: #{tpu_custom_call.1} parent=5 // pred_fallthru
        _
      %p330 = scmp.le.s32.totalorder 1, %s23
      %p331 = scmp.lt.s32.totalorder %s23, 3
      %p332 = pnand %p330, %p331
      %p333 = pneg %p332
      // Predicated region
      $region49: #{tpu_custom_call.1} parent=5 // pred_check
        _
      $region50: #{tpu_custom_call.1} parent=5 // pred_check_branch
        %335 = sbr.rel (%p332) target = $region52
      $region51: #{tpu_custom_call.1} parent=5 // pred_region
        %s336 = ssub.s32 %s23, 1
        %s337 = sand.u32 %s36, 1
        %s338 = scalar_lea.sflag [#allocation3], %s337
        %s339 = sand.u32 %s36, 1
        %s340 = smul.addr %s339, 8
        %s341 = scalar_lea.vmem [#allocation2], %s340
        // Predicated region
        $region53: #{tpu_custom_call.1} parent=51 // pred_check
          %p342 = pneg %p49
        $region54: #{tpu_custom_call.1} parent=51 // pred_check_branch
          %344 = sbr.rel (%p342) target = $region56
        $region55: #{tpu_custom_call.1} parent=51 // pred_region
          %345 = dma.done %s338, 128
        $region56: #{tpu_custom_call.1} parent=51 // pred_fallthru
          _
        // Predicated region
        $region57: #{tpu_custom_call.1} parent=51 // pred_check
          %p346 = pneg %p70
        $region58: #{tpu_custom_call.1} parent=51 // pred_check_branch
          %348 = sbr.rel (%p346) target = $region60
        $region59: #{tpu_custom_call.1} parent=51 // pred_region
          %349 = dma.done [#allocation6], 512
        $region60: #{tpu_custom_call.1} parent=51 // pred_fallthru
          _
        // Predicated region
        $region61: #{tpu_custom_call.1} parent=51 // pred_check
          %p350 = pneg %p91
        $region62: #{tpu_custom_call.1} parent=51 // pred_check_branch
          %352 = sbr.rel (%p350) target = $region64
        $region63: #{tpu_custom_call.1} parent=51 // pred_region
          %353 = dma.done [#allocation6], 512
        $region64: #{tpu_custom_call.1} parent=51 // pred_fallthru
          _
        // Predicated region
        $region65: #{tpu_custom_call.1} parent=51 // pred_check
          %p354 = pneg %p112
        $region66: #{tpu_custom_call.1} parent=51 // pred_check_branch
          %356 = sbr.rel (%p354) target = $region68
        $region67: #{tpu_custom_call.1} parent=51 // pred_region
          %357 = dma.done [#allocation9], 512
        $region68: #{tpu_custom_call.1} parent=51 // pred_fallthru
          _
        // Predicated region
        $region69: #{tpu_custom_call.1} parent=51 // pred_check
          %p358 = pneg %p133
        $region70: #{tpu_custom_call.1} parent=51 // pred_check_branch
          %360 = sbr.rel (%p358) target = $region72
        $region71: #{tpu_custom_call.1} parent=51 // pred_region
          %361 = dma.done [#allocation9], 512
        $region72: #{tpu_custom_call.1} parent=51 // pred_fallthru
          _
        // Predicated region
        $region73: #{tpu_custom_call.1} parent=51 // pred_check
          %p362 = pneg %p196
        $region74: #{tpu_custom_call.1} parent=51 // pred_check_branch
          %364 = sbr.rel (%p362) target = $region76
        $region75: #{tpu_custom_call.1} parent=51 // pred_region
          %365 = dma.done [#allocation12], 512
        $region76: #{tpu_custom_call.1} parent=51 // pred_fallthru
          _
        %s366 = sand.u32 %s36, 1
        %s367 = scalar_lea.sflag [#allocation3], %s366
        %s368 = sand.u32 %s36, 1
        %s369 = smul.addr %s368, 8
        %s370 = scalar_lea.vmem [#allocation2], %s369
        %p371 = pneg %p49
        %p372 = pneg %p46
        %p373 = pneg %p70
        %p374 = pneg %p67
        %p375 = pneg %p91
        %p376 = pneg %p88
        %p377 = pneg %p112
        %p378 = pneg %p109
        %p379 = pneg %p133
        %p380 = pneg %p130
        %p381 = pneg %p154
        %p382 = pneg %p151
        %p383 = pneg %p175
        %p384 = pneg %p172
        %p385 = pneg %p196
        %p386 = pneg %p193
        %p387 = pneg %p222
        %p388 = pneg %p219
        %s389 = sand.u32 %s209, 1
        %s390 = scalar_lea.sflag [#allocation4], %s389
        %s391 = sand.u32 %s209, 1
        %s392 = smul.addr %s391, 8
        %s393 = scalar_lea.vmem [#allocation13], %s392
        %v394 = vld [vmem:[%s341] sm:$0xff]
        %v395 = vld [vmem:[#allocation5] sm:$0xff]
        %v396 = vld [vmem:[#allocation5 + $0x8] sm:$0xff]
        %v397 = vld [vmem:[#allocation5 + $0x10] sm:$0xff]
        %v398 = vld [vmem:[#allocation5 + $0x18] sm:$0xff]
        %vm399 = vcmask 261120
        %v401 = vsel %vm399, %v394, 0
        %403 = vmatprep.subr.mxu0 0.0
        %404 = vmatpush1.msra.mxu0 %v395
        %405 = vmatprep.subr.mxu0 0.0
        %406 = vmatpush1.msra.mxu0 %v396
        %407 = vmatprep.subr.mxu0 0.0
        %408 = vmatpush1.msra.mxu0 %v397
        %409 = vmatprep.subr.mxu0 0.0
        %410 = vmatpush1.msra.mxu0 %v398
        %411 = vmatprep.subr.mxu0 0.0
        %412 = vmatpush1.msra.mxu0 0.0
        %413 = vmatprep.subr.mxu0 0.0
        %414 = vmatpush1.msra.mxu0 0.0
        %415 = vmatprep.subr.mxu0 0.0
        %416 = vmatpush1.msra.mxu0 0.0
        %417 = vmatprep.subr.mxu0 0.0
        %418 = vmatpush1.msra.mxu0 0.0
        %419 = vmatprep.subr.mxu0 0.0
        %420 = vmatpush1.msra.mxu0 0.0
        %421 = vmatprep.subr.mxu0 0.0
        %422 = vmatpush1.msra.mxu0 0.0
        %423 = vmatprep.subr.mxu0 0.0
        %424 = vmatpush1.msra.mxu0 0.0
        %425 = vmatprep.subr.mxu0 0.0
        %426 = vmatpush1.msra.mxu0 0.0
        %427 = vmatprep.subr.mxu0 0.0
        %428 = vmatpush1.msra.mxu0 0.0
        %429 = vmatprep.subr.mxu0 0.0
        %430 = vmatpush1.msra.mxu0 0.0
        %431 = vmatprep.subr.mxu0 0.0
        %432 = vmatpush1.msra.mxu0 0.0
        %433 = vmatprep.subr.mxu0 0.0
        %434 = vmatpush1.msra.mxu0 0.0
        %435 = vmatprep.subr.mxu0 0.0
        %436 = vmatpush1.msra.mxu0 0.0
        %437 = vmatprep.subr.mxu0 0.0
        %438 = vmatpush1.msra.mxu0 0.0
        %439 = vmatprep.subr.mxu0 0.0
        %440 = vmatpush1.msra.mxu0 0.0
        %441 = vmatprep.subr.mxu0 0.0
        %442 = vmatpush1.msra.mxu0 0.0
        %443 = vmatprep.subr.mxu0 0.0
        %444 = vmatpush1.msra.mxu0 0.0
        %445 = vmatprep.subr.mxu0 0.0
        %446 = vmatpush1.msra.mxu0 0.0
        %447 = vmatprep.subr.mxu0 0.0
        %448 = vmatpush1.msra.mxu0 0.0
        %449 = vmatprep.subr.mxu0 0.0
        %450 = vmatpush1.msra.mxu0 0.0
        %451 = vmatprep.subr.mxu0 0.0
        %452 = vmatpush1.msra.mxu0 0.0
        %453 = vmatprep.subr.mxu0 0.0
        %454 = vmatpush1.msra.mxu0 0.0
        %455 = vmatprep.subr.mxu0 0.0
        %456 = vmatpush1.msra.mxu0 0.0
        %457 = vmatprep.subr.mxu0 0.0
        %458 = vmatpush1.msra.mxu0 0.0
        %459 = vmatprep.subr.mxu0 0.0
        %460 = vmatpush1.msra.mxu0 0.0
        %461 = vmatprep.subr.mxu0 0.0
        %462 = vmatpush1.msra.mxu0 0.0
        %463 = vmatprep.subr.mxu0 0.0
        %464 = vmatpush1.msra.mxu0 0.0
        %465 = vmatprep.subr.mxu0 0.0
        %466 = vmatpush1.msra.mxu0 0.0
        %467 = vmatprep.mubr.f32.mxu0 0.0
        %468 = vmatmul.mubr.f32.gmra.mrb[0].mxu0 %v401
        %v469 = vpop.f32.mrb[0].mxu0
        %v470 = vadd.f32 0.0, %v469
        %v471 = vpop.f32.mrb[0].mxu0
        %472 = vdwg.mxu0
        %v473 = vld [vmem:[#allocation7] sm:$0xff]
        %v474 = vld [vmem:[#allocation7 + $0x8] sm:$0xff]
        %v475 = vld [vmem:[#allocation7 + $0x10] sm:$0xff]
        %v476 = vld [vmem:[#allocation7 + $0x18] sm:$0xff]
        %477 = vmatprep.subr.mxu0 0.0
        %478 = vmatpush1.msra.mxu0 %v473
        %479 = vmatprep.subr.mxu0 0.0
        %480 = vmatpush1.msra.mxu0 %v474
        %481 = vmatprep.subr.mxu0 0.0
        %482 = vmatpush1.msra.mxu0 %v475
        %483 = vmatprep.subr.mxu0 0.0
        %484 = vmatpush1.msra.mxu0 %v476
        %485 = vmatprep.subr.mxu0 0.0
        %486 = vmatpush1.msra.mxu0 0.0
        %487 = vmatprep.subr.mxu0 0.0
        %488 = vmatpush1.msra.mxu0 0.0
        %489 = vmatprep.subr.mxu0 0.0
        %490 = vmatpush1.msra.mxu0 0.0
        %491 = vmatprep.subr.mxu0 0.0
        %492 = vmatpush1.msra.mxu0 0.0
        %493 = vmatprep.subr.mxu0 0.0
        %494 = vmatpush1.msra.mxu0 0.0
        %495 = vmatprep.subr.mxu0 0.0
        %496 = vmatpush1.msra.mxu0 0.0
        %497 = vmatprep.subr.mxu0 0.0
        %498 = vmatpush1.msra.mxu0 0.0
        %499 = vmatprep.subr.mxu0 0.0
        %500 = vmatpush1.msra.mxu0 0.0
        %501 = vmatprep.subr.mxu0 0.0
        %502 = vmatpush1.msra.mxu0 0.0
        %503 = vmatprep.subr.mxu0 0.0
        %504 = vmatpush1.msra.mxu0 0.0
        %505 = vmatprep.subr.mxu0 0.0
        %506 = vmatpush1.msra.mxu0 0.0
        %507 = vmatprep.subr.mxu0 0.0
        %508 = vmatpush1.msra.mxu0 0.0
        %509 = vmatprep.subr.mxu0 0.0
        %510 = vmatpush1.msra.mxu0 0.0
        %511 = vmatprep.subr.mxu0 0.0
        %512 = vmatpush1.msra.mxu0 0.0
        %513 = vmatprep.subr.mxu0 0.0
        %514 = vmatpush1.msra.mxu0 0.0
        %515 = vmatprep.subr.mxu0 0.0
        %516 = vmatpush1.msra.mxu0 0.0
        %517 = vmatprep.subr.mxu0 0.0
        %518 = vmatpush1.msra.mxu0 0.0
        %519 = vmatprep.subr.mxu0 0.0
        %520 = vmatpush1.msra.mxu0 0.0
        %521 = vmatprep.subr.mxu0 0.0
        %522 = vmatpush1.msra.mxu0 0.0
        %523 = vmatprep.subr.mxu0 0.0
        %524 = vmatpush1.msra.mxu0 0.0
        %525 = vmatprep.subr.mxu0 0.0
        %526 = vmatpush1.msra.mxu0 0.0
        %527 = vmatprep.subr.mxu0 0.0
        %528 = vmatpush1.msra.mxu0 0.0
        %529 = vmatprep.subr.mxu0 0.0
        %530 = vmatpush1.msra.mxu0 0.0
        %531 = vmatprep.subr.mxu0 0.0
        %532 = vmatpush1.msra.mxu0 0.0
        %533 = vmatprep.subr.mxu0 0.0
        %534 = vmatpush1.msra.mxu0 0.0
        %535 = vmatprep.subr.mxu0 0.0
        %536 = vmatpush1.msra.mxu0 0.0
        %537 = vmatprep.subr.mxu0 0.0
        %538 = vmatpush1.msra.mxu0 0.0
        %539 = vmatprep.subr.mxu0 0.0
        %540 = vmatpush1.msra.mxu0 0.0
        %541 = vmatprep.mubr.f32.mxu0 0.0
        %542 = vmatmul.mubr.f32.gmra.mrb[0].mxu0 %v401
        %v543 = vpop.f32.mrb[0].mxu0
        %v544 = vadd.f32 0.0, %v543
        %v545 = vpop.f32.mrb[0].mxu0
        %546 = vdwg.mxu0
        %v547 = vld [vmem:[#allocation8] sm:$0xff]
        %v548 = vld [vmem:[#allocation8 + $0x8] sm:$0xff]
        %v549 = vld [vmem:[#allocation8 + $0x10] sm:$0xff]
        %v550 = vld [vmem:[#allocation8 + $0x18] sm:$0xff]
        %551 = vmatprep.subr.mxu0 0.0
        %552 = vmatpush1.msra.mxu0 %v547
        %553 = vmatprep.subr.mxu0 0.0
        %554 = vmatpush1.msra.mxu0 %v548
        %555 = vmatprep.subr.mxu0 0.0
        %556 = vmatpush1.msra.mxu0 %v549
        %557 = vmatprep.subr.mxu0 0.0
        %558 = vmatpush1.msra.mxu0 %v550
        %559 = vmatprep.subr.mxu0 0.0
        %560 = vmatpush1.msra.mxu0 0.0
        %561 = vmatprep.subr.mxu0 0.0
        %562 = vmatpush1.msra.mxu0 0.0
        %563 = vmatprep.subr.mxu0 0.0
        %564 = vmatpush1.msra.mxu0 0.0
        %565 = vmatprep.subr.mxu0 0.0
        %566 = vmatpush1.msra.mxu0 0.0
        %567 = vmatprep.subr.mxu0 0.0
        %568 = vmatpush1.msra.mxu0 0.0
        %569 = vmatprep.subr.mxu0 0.0
        %570 = vmatpush1.msra.mxu0 0.0
        %571 = vmatprep.subr.mxu0 0.0
        %572 = vmatpush1.msra.mxu0 0.0
        %573 = vmatprep.subr.mxu0 0.0
        %574 = vmatpush1.msra.mxu0 0.0
        %575 = vmatprep.subr.mxu0 0.0
        %576 = vmatpush1.msra.mxu0 0.0
        %577 = vmatprep.subr.mxu0 0.0
        %578 = vmatpush1.msra.mxu0 0.0
        %579 = vmatprep.subr.mxu0 0.0
        %580 = vmatpush1.msra.mxu0 0.0
        %581 = vmatprep.subr.mxu0 0.0
        %582 = vmatpush1.msra.mxu0 0.0
        %583 = vmatprep.subr.mxu0 0.0
        %584 = vmatpush1.msra.mxu0 0.0
        %585 = vmatprep.subr.mxu0 0.0
        %586 = vmatpush1.msra.mxu0 0.0
        %587 = vmatprep.subr.mxu0 0.0
        %588 = vmatpush1.msra.mxu0 0.0
        %589 = vmatprep.subr.mxu0 0.0
        %590 = vmatpush1.msra.mxu0 0.0
        %591 = vmatprep.subr.mxu0 0.0
        %592 = vmatpush1.msra.mxu0 0.0
        %593 = vmatprep.subr.mxu0 0.0
        %594 = vmatpush1.msra.mxu0 0.0
        %595 = vmatprep.subr.mxu0 0.0
        %596 = vmatpush1.msra.mxu0 0.0
        %597 = vmatprep.subr.mxu0 0.0
        %598 = vmatpush1.msra.mxu0 0.0
        %599 = vmatprep.subr.mxu0 0.0
        %600 = vmatpush1.msra.mxu0 0.0
        %601 = vmatprep.subr.mxu0 0.0
        %602 = vmatpush1.msra.mxu0 0.0
        %603 = vmatprep.subr.mxu0 0.0
        %604 = vmatpush1.msra.mxu0 0.0
        %605 = vmatprep.subr.mxu0 0.0
        %606 = vmatpush1.msra.mxu0 0.0
        %607 = vmatprep.subr.mxu0 0.0
        %608 = vmatpush1.msra.mxu0 0.0
        %609 = vmatprep.subr.mxu0 0.0
        %610 = vmatpush1.msra.mxu0 0.0
        %611 = vmatprep.subr.mxu0 0.0
        %612 = vmatpush1.msra.mxu0 0.0
        %613 = vmatprep.subr.mxu0 0.0
        %614 = vmatpush1.msra.mxu0 0.0
        %615 = vmatprep.mubr.f32.mxu0 0.0
        %616 = vmatmul.mubr.f32.gmra.mrb[0].mxu0 %v401
        %v617 = vpop.f32.mrb[0].mxu0
        %v618 = vadd.f32 0.0, %v617
        %v619 = vpop.f32.mrb[0].mxu0
        %620 = vdwg.mxu0
        %v621 = vld [vmem:[%s5] sm:$0xff]
        %v622 = vld [vmem:[%s6] sm:$0xff]
        %v623 = vld [vmem:[#allocation11] sm:$0xff]
        %v624 = vld [vmem:[#allocation11 + $0x8] sm:$0xff]
        %v625 = vld [vmem:[#allocation11 + $0x10] sm:$0xff]
        %v626 = vld [vmem:[#allocation11 + $0x18] sm:$0xff]
        %v627 = vmul.f32 %v470, %v621
        %v629 = vsel %vm399, %v470, 0
        %631 = vmatprep.subr.mxu0 0.0
        %632 = vmatpush1.msra.mxu0 %v623
        %633 = vmatprep.subr.mxu0 0.0
        %634 = vmatpush1.msra.mxu0 %v624
        %635 = vmatprep.subr.mxu0 0.0
        %636 = vmatpush1.msra.mxu0 %v625
        %637 = vmatprep.subr.mxu0 0.0
        %638 = vmatpush1.msra.mxu0 %v626
        %639 = vmatprep.subr.mxu0 0.0
        %640 = vmatpush1.msra.mxu0 0.0
        %641 = vmatprep.subr.mxu0 0.0
        %642 = vmatpush1.msra.mxu0 0.0
        %643 = vmatprep.subr.mxu0 0.0
        %644 = vmatpush1.msra.mxu0 0.0
        %645 = vmatprep.subr.mxu0 0.0
        %646 = vmatpush1.msra.mxu0 0.0
        %647 = vmatprep.subr.mxu0 0.0
        %648 = vmatpush1.msra.mxu0 0.0
        %649 = vmatprep.subr.mxu0 0.0
        %650 = vmatpush1.msra.mxu0 0.0
        %651 = vmatprep.subr.mxu0 0.0
        %652 = vmatpush1.msra.mxu0 0.0
        %653 = vmatprep.subr.mxu0 0.0
        %654 = vmatpush1.msra.mxu0 0.0
        %655 = vmatprep.subr.mxu0 0.0
        %656 = vmatpush1.msra.mxu0 0.0
        %657 = vmatprep.subr.mxu0 0.0
        %658 = vmatpush1.msra.mxu0 0.0
        %659 = vmatprep.subr.mxu0 0.0
        %660 = vmatpush1.msra.mxu0 0.0
        %661 = vmatprep.subr.mxu0 0.0
        %662 = vmatpush1.msra.mxu0 0.0
        %663 = vmatprep.subr.mxu0 0.0
        %664 = vmatpush1.msra.mxu0 0.0
        %665 = vmatprep.subr.mxu0 0.0
        %666 = vmatpush1.msra.mxu0 0.0
        %667 = vmatprep.subr.mxu0 0.0
        %668 = vmatpush1.msra.mxu0 0.0
        %669 = vmatprep.subr.mxu0 0.0
        %670 = vmatpush1.msra.mxu0 0.0
        %671 = vmatprep.subr.mxu0 0.0
        %672 = vmatpush1.msra.mxu0 0.0
        %673 = vmatprep.subr.mxu0 0.0
        %674 = vmatpush1.msra.mxu0 0.0
        %675 = vmatprep.subr.mxu0 0.0
        %676 = vmatpush1.msra.mxu0 0.0
        %677 = vmatprep.subr.mxu0 0.0
        %678 = vmatpush1.msra.mxu0 0.0
        %679 = vmatprep.subr.mxu0 0.0
        %680 = vmatpush1.msra.mxu0 0.0
        %681 = vmatprep.subr.mxu0 0.0
        %682 = vmatpush1.msra.mxu0 0.0
        %683 = vmatprep.subr.mxu0 0.0
        %684 = vmatpush1.msra.mxu0 0.0
        %685 = vmatprep.subr.mxu0 0.0
        %686 = vmatpush1.msra.mxu0 0.0
        %687 = vmatprep.subr.mxu0 0.0
        %688 = vmatpush1.msra.mxu0 0.0
        %689 = vmatprep.subr.mxu0 0.0
        %690 = vmatpush1.msra.mxu0 0.0
        %691 = vmatprep.subr.mxu0 0.0
        %692 = vmatpush1.msra.mxu0 0.0
        %693 = vmatprep.subr.mxu0 0.0
        %694 = vmatpush1.msra.mxu0 0.0
        %695 = vmatprep.mubr.f32.mxu0 0.0
        %696 = vmatmul.mubr.f32.gmra.mrb[0].mxu0 %v629
        %v697 = vpop.f32.mrb[0].mxu0
        %v698 = vadd.f32 0.0, %v697
        %v699 = vpop.f32.mrb[0].mxu0
        %700 = vdwg.mxu0
        %v701 = vmul.f32 %v698, %v622
        %v702 = vadd.f32 %v627, %v701
        %v703 = vmul.f32 %v544, %v621
        %v705 = vsel %vm399, %v544, 0
        %707 = vmatprep.subr.mxu0 0.0
        %708 = vmatpush1.msra.mxu0 %v623
        %709 = vmatprep.subr.mxu0 0.0
        %710 = vmatpush1.msra.mxu0 %v624
        %711 = vmatprep.subr.mxu0 0.0
        %712 = vmatpush1.msra.mxu0 %v625
        %713 = vmatprep.subr.mxu0 0.0
        %714 = vmatpush1.msra.mxu0 %v626
        %715 = vmatprep.subr.mxu0 0.0
        %716 = vmatpush1.msra.mxu0 0.0
        %717 = vmatprep.subr.mxu0 0.0
        %718 = vmatpush1.msra.mxu0 0.0
        %719 = vmatprep.subr.mxu0 0.0
        %720 = vmatpush1.msra.mxu0 0.0
        %721 = vmatprep.subr.mxu0 0.0
        %722 = vmatpush1.msra.mxu0 0.0
        %723 = vmatprep.subr.mxu0 0.0
        %724 = vmatpush1.msra.mxu0 0.0
        %725 = vmatprep.subr.mxu0 0.0
        %726 = vmatpush1.msra.mxu0 0.0
        %727 = vmatprep.subr.mxu0 0.0
        %728 = vmatpush1.msra.mxu0 0.0
        %729 = vmatprep.subr.mxu0 0.0
        %730 = vmatpush1.msra.mxu0 0.0
        %731 = vmatprep.subr.mxu0 0.0
        %732 = vmatpush1.msra.mxu0 0.0
        %733 = vmatprep.subr.mxu0 0.0
        %734 = vmatpush1.msra.mxu0 0.0
        %735 = vmatprep.subr.mxu0 0.0
        %736 = vmatpush1.msra.mxu0 0.0
        %737 = vmatprep.subr.mxu0 0.0
        %738 = vmatpush1.msra.mxu0 0.0
        %739 = vmatprep.subr.mxu0 0.0
        %740 = vmatpush1.msra.mxu0 0.0
        %741 = vmatprep.subr.mxu0 0.0
        %742 = vmatpush1.msra.mxu0 0.0
        %743 = vmatprep.subr.mxu0 0.0
        %744 = vmatpush1.msra.mxu0 0.0
        %745 = vmatprep.subr.mxu0 0.0
        %746 = vmatpush1.msra.mxu0 0.0
        %747 = vmatprep.subr.mxu0 0.0
        %748 = vmatpush1.msra.mxu0 0.0
        %749 = vmatprep.subr.mxu0 0.0
        %750 = vmatpush1.msra.mxu0 0.0
        %751 = vmatprep.subr.mxu0 0.0
        %752 = vmatpush1.msra.mxu0 0.0
        %753 = vmatprep.subr.mxu0 0.0
        %754 = vmatpush1.msra.mxu0 0.0
        %755 = vmatprep.subr.mxu0 0.0
        %756 = vmatpush1.msra.mxu0 0.0
        %757 = vmatprep.subr.mxu0 0.0
        %758 = vmatpush1.msra.mxu0 0.0
        %759 = vmatprep.subr.mxu0 0.0
        %760 = vmatpush1.msra.mxu0 0.0
        %761 = vmatprep.subr.mxu0 0.0
        %762 = vmatpush1.msra.mxu0 0.0
        %763 = vmatprep.subr.mxu0 0.0
        %764 = vmatpush1.msra.mxu0 0.0
        %765 = vmatprep.subr.mxu0 0.0
        %766 = vmatpush1.msra.mxu0 0.0
        %767 = vmatprep.subr.mxu0 0.0
        %768 = vmatpush1.msra.mxu0 0.0
        %769 = vmatprep.subr.mxu0 0.0
        %770 = vmatpush1.msra.mxu0 0.0
        %771 = vmatprep.mubr.f32.mxu0 0.0
        %772 = vmatmul.mubr.f32.gmra.mrb[0].mxu0 %v705
        %v773 = vpop.f32.mrb[0].mxu0
        %v774 = vadd.f32 0.0, %v773
        %v775 = vpop.f32.mrb[0].mxu0
        %776 = vdwg.mxu0
        %v777 = vmul.f32 %v774, %v622
        %v778 = vadd.f32 %v703, %v777
        %v779 = vmul.f32 %v702, 0.35355338
        %vm780 = vcmask 64512
        %v782 = vsel %vm780, %v779, 0
        %v785 = vsel %vm780, %v778, 0
        %787 = vmatprep.subr.mxu0 0.0
        %788 = vmatpush1.xpose.msra.mxu0 %v785
        %789 = vmatprep.subr.mxu0 0.0
        %790 = vmatpush1.xpose.msra.mxu0 0.0
        %791 = vmatprep.subr.mxu0 0.0
        %792 = vmatpush1.xpose.msra.mxu0 0.0
        %793 = vmatprep.subr.mxu0 0.0
        %794 = vmatpush1.xpose.msra.mxu0 0.0
        %795 = vmatprep.subr.mxu0 0.0
        %796 = vmatpush1.xpose.msra.mxu0 0.0
        %797 = vmatprep.subr.mxu0 0.0
        %798 = vmatpush1.xpose.msra.mxu0 0.0
        %799 = vmatprep.subr.mxu0 0.0
        %800 = vmatpush1.xpose.msra.mxu0 0.0
        %801 = vmatprep.subr.mxu0 0.0
        %802 = vmatpush1.xpose.msra.mxu0 0.0
        %803 = vmatprep.subr.mxu0 0.0
        %804 = vmatpush1.xpose.msra.mxu0 0.0
        %805 = vmatprep.subr.mxu0 0.0
        %806 = vmatpush1.xpose.msra.mxu0 0.0
        %807 = vmatprep.subr.mxu0 0.0
        %808 = vmatpush1.xpose.msra.mxu0 0.0
        %809 = vmatprep.subr.mxu0 0.0
        %810 = vmatpush1.xpose.msra.mxu0 0.0
        %811 = vmatprep.subr.mxu0 0.0
        %812 = vmatpush1.xpose.msra.mxu0 0.0
        %813 = vmatprep.subr.mxu0 0.0
        %814 = vmatpush1.xpose.msra.mxu0 0.0
        %815 = vmatprep.subr.mxu0 0.0
        %816 = vmatpush1.xpose.msra.mxu0 0.0
        %817 = vmatprep.subr.mxu0 0.0
        %818 = vmatpush1.xpose.msra.mxu0 0.0
        %819 = vmatprep.subr.mxu0 0.0
        %820 = vmatpush1.xpose.msra.mxu0 0.0
        %821 = vmatprep.subr.mxu0 0.0
        %822 = vmatpush1.xpose.msra.mxu0 0.0
        %823 = vmatprep.subr.mxu0 0.0
        %824 = vmatpush1.xpose.msra.mxu0 0.0
        %825 = vmatprep.subr.mxu0 0.0
        %826 = vmatpush1.xpose.msra.mxu0 0.0
        %827 = vmatprep.subr.mxu0 0.0
        %828 = vmatpush1.xpose.msra.mxu0 0.0
        %829 = vmatprep.subr.mxu0 0.0
        %830 = vmatpush1.xpose.msra.mxu0 0.0
        %831 = vmatprep.subr.mxu0 0.0
        %832 = vmatpush1.xpose.msra.mxu0 0.0
        %833 = vmatprep.subr.mxu0 0.0
        %834 = vmatpush1.xpose.msra.mxu0 0.0
        %835 = vmatprep.subr.mxu0 0.0
        %836 = vmatpush1.xpose.msra.mxu0 0.0
        %837 = vmatprep.subr.mxu0 0.0
        %838 = vmatpush1.xpose.msra.mxu0 0.0
        %839 = vmatprep.subr.mxu0 0.0
        %840 = vmatpush1.xpose.msra.mxu0 0.0
        %841 = vmatprep.subr.mxu0 0.0
        %842 = vmatpush1.xpose.msra.mxu0 0.0
        %843 = vmatprep.subr.mxu0 0.0
        %844 = vmatpush1.xpose.msra.mxu0 0.0
        %845 = vmatprep.subr.mxu0 0.0
        %846 = vmatpush1.xpose.msra.mxu0 0.0
        %847 = vmatprep.subr.mxu0 0.0
        %848 = vmatpush1.xpose.msra.mxu0 0.0
        %849 = vmatprep.subr.mxu0 0.0
        %850 = vmatpush1.xpose.msra.mxu0 0.0
        %851 = vmatprep.mubr.f32.mxu0 0.0
        %852 = vmatmul.mubr.f32.gmra.mrb[0].mxu0 %v782
        %v853 = vpop.f32.mrb[0].mxu0
        %v854 = vadd.f32 0.0, %v853
        %v855 = vpop.f32.mrb[0].mxu0
        %856 = vdwg.mxu0
        %v857 = vsel %vm780, %v854, -inf
        %858 = vmax.xlane.f32.xlu0 %v857
        %v859 = vpop.xlane.xlu0 %858
        %v860 = vsub.f32 %v854, %v859
        %v861 = vmul.f32 %v860, 1.442695
        %v862 = vpow.pop %v861
        %v863 = vsel %vm780, %v862, 0.0
        %864 = vadd.xlane.f32.xlu0 %v863
        %v865 = vpop.xlane.xlu0 %864
        %v866 = vrcp.pop %v865
        %v867 = vmul.f32 %v862, %v866
        %v869 = vsel %vm780, %v867, 0
        %871 = vmatprep.subr.mxu0 0.0
        %872 = vmatpush1.msra.mxu0 %v618
        %873 = vmatprep.subr.mxu0 0.0
        %874 = vmatpush1.msra.mxu0 0.0
        %875 = vmatprep.subr.mxu0 0.0
        %876 = vmatpush1.msra.mxu0 0.0
        %877 = vmatprep.subr.mxu0 0.0
        %878 = vmatpush1.msra.mxu0 0.0
        %879 = vmatprep.subr.mxu0 0.0
        %880 = vmatpush1.msra.mxu0 0.0
        %881 = vmatprep.subr.mxu0 0.0
        %882 = vmatpush1.msra.mxu0 0.0
        %883 = vmatprep.subr.mxu0 0.0
        %884 = vmatpush1.msra.mxu0 0.0
        %885 = vmatprep.subr.mxu0 0.0
        %886 = vmatpush1.msra.mxu0 0.0
        %887 = vmatprep.subr.mxu0 0.0
        %888 = vmatpush1.msra.mxu0 0.0
        %889 = vmatprep.subr.mxu0 0.0
        %890 = vmatpush1.msra.mxu0 0.0
        %891 = vmatprep.subr.mxu0 0.0
        %892 = vmatpush1.msra.mxu0 0.0
        %893 = vmatprep.subr.mxu0 0.0
        %894 = vmatpush1.msra.mxu0 0.0
        %895 = vmatprep.subr.mxu0 0.0
        %896 = vmatpush1.msra.mxu0 0.0
        %897 = vmatprep.subr.mxu0 0.0
        %898 = vmatpush1.msra.mxu0 0.0
        %899 = vmatprep.subr.mxu0 0.0
        %900 = vmatpush1.msra.mxu0 0.0
        %901 = vmatprep.subr.mxu0 0.0
        %902 = vmatpush1.msra.mxu0 0.0
        %903 = vmatprep.subr.mxu0 0.0
        %904 = vmatpush1.msra.mxu0 0.0
        %905 = vmatprep.subr.mxu0 0.0
        %906 = vmatpush1.msra.mxu0 0.0
        %907 = vmatprep.subr.mxu0 0.0
        %908 = vmatpush1.msra.mxu0 0.0
        %909 = vmatprep.subr.mxu0 0.0
        %910 = vmatpush1.msra.mxu0 0.0
        %911 = vmatprep.subr.mxu0 0.0
        %912 = vmatpush1.msra.mxu0 0.0
        %913 = vmatprep.subr.mxu0 0.0
        %914 = vmatpush1.msra.mxu0 0.0
        %915 = vmatprep.subr.mxu0 0.0
        %916 = vmatpush1.msra.mxu0 0.0
        %917 = vmatprep.subr.mxu0 0.0
        %918 = vmatpush1.msra.mxu0 0.0
        %919 = vmatprep.subr.mxu0 0.0
        %920 = vmatpush1.msra.mxu0 0.0
        %921 = vmatprep.subr.mxu0 0.0
        %922 = vmatpush1.msra.mxu0 0.0
        %923 = vmatprep.subr.mxu0 0.0
        %924 = vmatpush1.msra.mxu0 0.0
        %925 = vmatprep.subr.mxu0 0.0
        %926 = vmatpush1.msra.mxu0 0.0
        %927 = vmatprep.subr.mxu0 0.0
        %928 = vmatpush1.msra.mxu0 0.0
        %929 = vmatprep.subr.mxu0 0.0
        %930 = vmatpush1.msra.mxu0 0.0
        %931 = vmatprep.subr.mxu0 0.0
        %932 = vmatpush1.msra.mxu0 0.0
        %933 = vmatprep.subr.mxu0 0.0
        %934 = vmatpush1.msra.mxu0 0.0
        %935 = vmatprep.mubr.f32.mxu0 0.0
        %936 = vmatmul.mubr.f32.gmra.mrb[0].mxu0 %v869
        %v937 = vpop.f32.mrb[0].mxu0
        %v938 = vadd.f32 0.0, %v937
        %v939 = vpop.f32.mrb[0].mxu0
        %940 = vdwg.mxu0
        %941 = vrot.lane.b32.xlu0 %v779, 120
        %v942 = vpop.permute.xlu0 %941
        %943 = vrot.lane.b32.xlu0 %v778, 120
        %v944 = vpop.permute.xlu0 %943
        %v945 = vsel %vm780, %v942, 0
        %v947 = vsel %vm780, %v944, 0
        %949 = vmatprep.subr.mxu0 0.0
        %950 = vmatpush1.xpose.msra.mxu0 %v947
        %951 = vmatprep.subr.mxu0 0.0
        %952 = vmatpush1.xpose.msra.mxu0 0.0
        %953 = vmatprep.subr.mxu0 0.0
        %954 = vmatpush1.xpose.msra.mxu0 0.0
        %955 = vmatprep.subr.mxu0 0.0
        %956 = vmatpush1.xpose.msra.mxu0 0.0
        %957 = vmatprep.subr.mxu0 0.0
        %958 = vmatpush1.xpose.msra.mxu0 0.0
        %959 = vmatprep.subr.mxu0 0.0
        %960 = vmatpush1.xpose.msra.mxu0 0.0
        %961 = vmatprep.subr.mxu0 0.0
        %962 = vmatpush1.xpose.msra.mxu0 0.0
        %963 = vmatprep.subr.mxu0 0.0
        %964 = vmatpush1.xpose.msra.mxu0 0.0
        %965 = vmatprep.subr.mxu0 0.0
        %966 = vmatpush1.xpose.msra.mxu0 0.0
        %967 = vmatprep.subr.mxu0 0.0
        %968 = vmatpush1.xpose.msra.mxu0 0.0
        %969 = vmatprep.subr.mxu0 0.0
        %970 = vmatpush1.xpose.msra.mxu0 0.0
        %971 = vmatprep.subr.mxu0 0.0
        %972 = vmatpush1.xpose.msra.mxu0 0.0
        %973 = vmatprep.subr.mxu0 0.0
        %974 = vmatpush1.xpose.msra.mxu0 0.0
        %975 = vmatprep.subr.mxu0 0.0
        %976 = vmatpush1.xpose.msra.mxu0 0.0
        %977 = vmatprep.subr.mxu0 0.0
        %978 = vmatpush1.xpose.msra.mxu0 0.0
        %979 = vmatprep.subr.mxu0 0.0
        %980 = vmatpush1.xpose.msra.mxu0 0.0
        %981 = vmatprep.subr.mxu0 0.0
        %982 = vmatpush1.xpose.msra.mxu0 0.0
        %983 = vmatprep.subr.mxu0 0.0
        %984 = vmatpush1.xpose.msra.mxu0 0.0
        %985 = vmatprep.subr.mxu0 0.0
        %986 = vmatpush1.xpose.msra.mxu0 0.0
        %987 = vmatprep.subr.mxu0 0.0
        %988 = vmatpush1.xpose.msra.mxu0 0.0
        %989 = vmatprep.subr.mxu0 0.0
        %990 = vmatpush1.xpose.msra.mxu0 0.0
        %991 = vmatprep.subr.mxu0 0.0
        %992 = vmatpush1.xpose.msra.mxu0 0.0
        %993 = vmatprep.subr.mxu0 0.0
        %994 = vmatpush1.xpose.msra.mxu0 0.0
        %995 = vmatprep.subr.mxu0 0.0
        %996 = vmatpush1.xpose.msra.mxu0 0.0
        %997 = vmatprep.subr.mxu0 0.0
        %998 = vmatpush1.xpose.msra.mxu0 0.0
        %999 = vmatprep.subr.mxu0 0.0
        %1000 = vmatpush1.xpose.msra.mxu0 0.0
        %1001 = vmatprep.subr.mxu0 0.0
        %1002 = vmatpush1.xpose.msra.mxu0 0.0
        %1003 = vmatprep.subr.mxu0 0.0
        %1004 = vmatpush1.xpose.msra.mxu0 0.0
        %1005 = vmatprep.subr.mxu0 0.0
        %1006 = vmatpush1.xpose.msra.mxu0 0.0
        %1007 = vmatprep.subr.mxu0 0.0
        %1008 = vmatpush1.xpose.msra.mxu0 0.0
        %1009 = vmatprep.subr.mxu0 0.0
        %1010 = vmatpush1.xpose.msra.mxu0 0.0
        %1011 = vmatprep.subr.mxu0 0.0
        %1012 = vmatpush1.xpose.msra.mxu0 0.0
        %1013 = vmatprep.mubr.f32.mxu0 0.0
        %1014 = vmatmul.mubr.f32.gmra.mrb[0].mxu0 %v945
        %v1015 = vpop.f32.mrb[0].mxu0
        %v1016 = vadd.f32 0.0, %v1015
        %v1017 = vpop.f32.mrb[0].mxu0
        %1018 = vdwg.mxu0
        %v1019 = vsel %vm780, %v1016, -inf
        %1020 = vmax.xlane.f32.xlu0 %v1019
        %v1021 = vpop.xlane.xlu0 %1020
        %v1022 = vsub.f32 %v1016, %v1021
        %v1023 = vmul.f32 %v1022, 1.442695
        %v1024 = vpow.pop %v1023
        %v1025 = vsel %vm780, %v1024, 0.0
        %1026 = vadd.xlane.f32.xlu0 %v1025
        %v1027 = vpop.xlane.xlu0 %1026
        %v1028 = vrcp.pop %v1027
        %v1029 = vmul.f32 %v1024, %v1028
        %1031 = vrot.lane.b32.xlu0 %v618, 120
        %v1032 = vpop.permute.xlu0 %1031
        %v1035 = vsel %vm780, %v1029, 0
        %1037 = vmatprep.subr.mxu0 0.0
        %1038 = vmatpush1.msra.mxu0 %v1032
        %1039 = vmatprep.subr.mxu0 0.0
        %1040 = vmatpush1.msra.mxu0 0.0
        %1041 = vmatprep.subr.mxu0 0.0
        %1042 = vmatpush1.msra.mxu0 0.0
        %1043 = vmatprep.subr.mxu0 0.0
        %1044 = vmatpush1.msra.mxu0 0.0
        %1045 = vmatprep.subr.mxu0 0.0
        %1046 = vmatpush1.msra.mxu0 0.0
        %1047 = vmatprep.subr.mxu0 0.0
        %1048 = vmatpush1.msra.mxu0 0.0
        %1049 = vmatprep.subr.mxu0 0.0
        %1050 = vmatpush1.msra.mxu0 0.0
        %1051 = vmatprep.subr.mxu0 0.0
        %1052 = vmatpush1.msra.mxu0 0.0
        %1053 = vmatprep.subr.mxu0 0.0
        %1054 = vmatpush1.msra.mxu0 0.0
        %1055 = vmatprep.subr.mxu0 0.0
        %1056 = vmatpush1.msra.mxu0 0.0
        %1057 = vmatprep.subr.mxu0 0.0
        %1058 = vmatpush1.msra.mxu0 0.0
        %1059 = vmatprep.subr.mxu0 0.0
        %1060 = vmatpush1.msra.mxu0 0.0
        %1061 = vmatprep.subr.mxu0 0.0
        %1062 = vmatpush1.msra.mxu0 0.0
        %1063 = vmatprep.subr.mxu0 0.0
        %1064 = vmatpush1.msra.mxu0 0.0
        %1065 = vmatprep.subr.mxu0 0.0
        %1066 = vmatpush1.msra.mxu0 0.0
        %1067 = vmatprep.subr.mxu0 0.0
        %1068 = vmatpush1.msra.mxu0 0.0
        %1069 = vmatprep.subr.mxu0 0.0
        %1070 = vmatpush1.msra.mxu0 0.0
        %1071 = vmatprep.subr.mxu0 0.0
        %1072 = vmatpush1.msra.mxu0 0.0
        %1073 = vmatprep.subr.mxu0 0.0
        %1074 = vmatpush1.msra.mxu0 0.0
        %1075 = vmatprep.subr.mxu0 0.0
        %1076 = vmatpush1.msra.mxu0 0.0
        %1077 = vmatprep.subr.mxu0 0.0
        %1078 = vmatpush1.msra.mxu0 0.0
        %1079 = vmatprep.subr.mxu0 0.0
        %1080 = vmatpush1.msra.mxu0 0.0
        %1081 = vmatprep.subr.mxu0 0.0
        %1082 = vmatpush1.msra.mxu0 0.0
        %1083 = vmatprep.subr.mxu0 0.0
        %1084 = vmatpush1.msra.mxu0 0.0
        %1085 = vmatprep.subr.mxu0 0.0
        %1086 = vmatpush1.msra.mxu0 0.0
        %1087 = vmatprep.subr.mxu0 0.0
        %1088 = vmatpush1.msra.mxu0 0.0
        %1089 = vmatprep.subr.mxu0 0.0
        %1090 = vmatpush1.msra.mxu0 0.0
        %1091 = vmatprep.subr.mxu0 0.0
        %1092 = vmatpush1.msra.mxu0 0.0
        %1093 = vmatprep.subr.mxu0 0.0
        %1094 = vmatpush1.msra.mxu0 0.0
        %1095 = vmatprep.subr.mxu0 0.0
        %1096 = vmatpush1.msra.mxu0 0.0
        %1097 = vmatprep.subr.mxu0 0.0
        %1098 = vmatpush1.msra.mxu0 0.0
        %1099 = vmatprep.subr.mxu0 0.0
        %1100 = vmatpush1.msra.mxu0 0.0
        %1101 = vmatprep.mubr.f32.mxu0 0.0
        %1102 = vmatmul.mubr.f32.gmra.mrb[0].mxu0 %v1035
        %v1103 = vpop.f32.mrb[0].mxu0
        %v1104 = vadd.f32 0.0, %v1103
        %v1105 = vpop.f32.mrb[0].mxu0
        %1106 = vdwg.mxu0
        %1107 = vrot.lane.b32.xlu0 %v779, 112
        %v1108 = vpop.permute.xlu0 %1107
        %1109 = vrot.lane.b32.xlu0 %v778, 112
        %v1110 = vpop.permute.xlu0 %1109
        %v1111 = vsel %vm780, %v1108, 0
        %v1113 = vsel %vm780, %v1110, 0
        %1115 = vmatprep.subr.mxu0 0.0
        %1116 = vmatpush1.xpose.msra.mxu0 %v1113
        %1117 = vmatprep.subr.mxu0 0.0
        %1118 = vmatpush1.xpose.msra.mxu0 0.0
        %1119 = vmatprep.subr.mxu0 0.0
        %1120 = vmatpush1.xpose.msra.mxu0 0.0
        %1121 = vmatprep.subr.mxu0 0.0
        %1122 = vmatpush1.xpose.msra.mxu0 0.0
        %1123 = vmatprep.subr.mxu0 0.0
        %1124 = vmatpush1.xpose.msra.mxu0 0.0
        %1125 = vmatprep.subr.mxu0 0.0
        %1126 = vmatpush1.xpose.msra.mxu0 0.0
        %1127 = vmatprep.subr.mxu0 0.0
        %1128 = vmatpush1.xpose.msra.mxu0 0.0
        %1129 = vmatprep.subr.mxu0 0.0
        %1130 = vmatpush1.xpose.msra.mxu0 0.0
        %1131 = vmatprep.subr.mxu0 0.0
        %1132 = vmatpush1.xpose.msra.mxu0 0.0
        %1133 = vmatprep.subr.mxu0 0.0
        %1134 = vmatpush1.xpose.msra.mxu0 0.0
        %1135 = vmatprep.subr.mxu0 0.0
        %1136 = vmatpush1.xpose.msra.mxu0 0.0
        %1137 = vmatprep.subr.mxu0 0.0
        %1138 = vmatpush1.xpose.msra.mxu0 0.0
        %1139 = vmatprep.subr.mxu0 0.0
        %1140 = vmatpush1.xpose.msra.mxu0 0.0
        %1141 = vmatprep.subr.mxu0 0.0
        %1142 = vmatpush1.xpose.msra.mxu0 0.0
        %1143 = vmatprep.subr.mxu0 0.0
        %1144 = vmatpush1.xpose.msra.mxu0 0.0
        %1145 = vmatprep.subr.mxu0 0.0
        %1146 = vmatpush1.xpose.msra.mxu0 0.0
        %1147 = vmatprep.subr.mxu0 0.0
        %1148 = vmatpush1.xpose.msra.mxu0 0.0
        %1149 = vmatprep.subr.mxu0 0.0
        %1150 = vmatpush1.xpose.msra.mxu0 0.0
        %1151 = vmatprep.subr.mxu0 0.0
        %1152 = vmatpush1.xpose.msra.mxu0 0.0
        %1153 = vmatprep.subr.mxu0 0.0
        %1154 = vmatpush1.xpose.msra.mxu0 0.0
        %1155 = vmatprep.subr.mxu0 0.0
        %1156 = vmatpush1.xpose.msra.mxu0 0.0
        %1157 = vmatprep.subr.mxu0 0.0
        %1158 = vmatpush1.xpose.msra.mxu0 0.0
        %1159 = vmatprep.subr.mxu0 0.0
        %1160 = vmatpush1.xpose.msra.mxu0 0.0
        %1161 = vmatprep.subr.mxu0 0.0
        %1162 = vmatpush1.xpose.msra.mxu0 0.0
        %1163 = vmatprep.subr.mxu0 0.0
        %1164 = vmatpush1.xpose.msra.mxu0 0.0
        %1165 = vmatprep.subr.mxu0 0.0
        %1166 = vmatpush1.xpose.msra.mxu0 0.0
        %1167 = vmatprep.subr.mxu0 0.0
        %1168 = vmatpush1.xpose.msra.mxu0 0.0
        %1169 = vmatprep.subr.mxu0 0.0
        %1170 = vmatpush1.xpose.msra.mxu0 0.0
        %1171 = vmatprep.subr.mxu0 0.0
        %1172 = vmatpush1.xpose.msra.mxu0 0.0
        %1173 = vmatprep.subr.mxu0 0.0
        %1174 = vmatpush1.xpose.msra.mxu0 0.0
        %1175 = vmatprep.subr.mxu0 0.0
        %1176 = vmatpush1.xpose.msra.mxu0 0.0
        %1177 = vmatprep.subr.mxu0 0.0
        %1178 = vmatpush1.xpose.msra.mxu0 0.0
        %1179 = vmatprep.mubr.f32.mxu0 0.0
        %1180 = vmatmul.mubr.f32.gmra.mrb[0].mxu0 %v1111
        %v1181 = vpop.f32.mrb[0].mxu0
        %v1182 = vadd.f32 0.0, %v1181
        %v1183 = vpop.f32.mrb[0].mxu0
        %1184 = vdwg.mxu0
        %v1185 = vsel %vm780, %v1182, -inf
        %1186 = vmax.xlane.f32.xlu0 %v1185
        %v1187 = vpop.xlane.xlu0 %1186
        %v1188 = vsub.f32 %v1182, %v1187
        %v1189 = vmul.f32 %v1188, 1.442695
        %v1190 = vpow.pop %v1189
        %v1191 = vsel %vm780, %v1190, 0.0
        %1192 = vadd.xlane.f32.xlu0 %v1191
        %v1193 = vpop.xlane.xlu0 %1192
        %v1194 = vrcp.pop %v1193
        %v1195 = vmul.f32 %v1190, %v1194
        %1196 = vrot.lane.b32.xlu0 %v618, 112
        %v1197 = vpop.permute.xlu0 %1196
        %v1200 = vsel %vm780, %v1195, 0
        %1202 = vmatprep.subr.mxu0 0.0
        %1203 = vmatpush1.msra.mxu0 %v1197
        %1204 = vmatprep.subr.mxu0 0.0
        %1205 = vmatpush1.msra.mxu0 0.0
        %1206 = vmatprep.subr.mxu0 0.0
        %1207 = vmatpush1.msra.mxu0 0.0
        %1208 = vmatprep.subr.mxu0 0.0
        %1209 = vmatpush1.msra.mxu0 0.0
        %1210 = vmatprep.subr.mxu0 0.0
        %1211 = vmatpush1.msra.mxu0 0.0
        %1212 = vmatprep.subr.mxu0 0.0
        %1213 = vmatpush1.msra.mxu0 0.0
        %1214 = vmatprep.subr.mxu0 0.0
        %1215 = vmatpush1.msra.mxu0 0.0
        %1216 = vmatprep.subr.mxu0 0.0
        %1217 = vmatpush1.msra.mxu0 0.0
        %1218 = vmatprep.subr.mxu0 0.0
        %1219 = vmatpush1.msra.mxu0 0.0
        %1220 = vmatprep.subr.mxu0 0.0
        %1221 = vmatpush1.msra.mxu0 0.0
        %1222 = vmatprep.subr.mxu0 0.0
        %1223 = vmatpush1.msra.mxu0 0.0
        %1224 = vmatprep.subr.mxu0 0.0
        %1225 = vmatpush1.msra.mxu0 0.0
        %1226 = vmatprep.subr.mxu0 0.0
        %1227 = vmatpush1.msra.mxu0 0.0
        %1228 = vmatprep.subr.mxu0 0.0
        %1229 = vmatpush1.msra.mxu0 0.0
        %1230 = vmatprep.subr.mxu0 0.0
        %1231 = vmatpush1.msra.mxu0 0.0
        %1232 = vmatprep.subr.mxu0 0.0
        %1233 = vmatpush1.msra.mxu0 0.0
        %1234 = vmatprep.subr.mxu0 0.0
        %1235 = vmatpush1.msra.mxu0 0.0
        %1236 = vmatprep.subr.mxu0 0.0
        %1237 = vmatpush1.msra.mxu0 0.0
        %1238 = vmatprep.subr.mxu0 0.0
        %1239 = vmatpush1.msra.mxu0 0.0
        %1240 = vmatprep.subr.mxu0 0.0
        %1241 = vmatpush1.msra.mxu0 0.0
        %1242 = vmatprep.subr.mxu0 0.0
        %1243 = vmatpush1.msra.mxu0 0.0
        %1244 = vmatprep.subr.mxu0 0.0
        %1245 = vmatpush1.msra.mxu0 0.0
        %1246 = vmatprep.subr.mxu0 0.0
        %1247 = vmatpush1.msra.mxu0 0.0
        %1248 = vmatprep.subr.mxu0 0.0
        %1249 = vmatpush1.msra.mxu0 0.0
        %1250 = vmatprep.subr.mxu0 0.0
        %1251 = vmatpush1.msra.mxu0 0.0
        %1252 = vmatprep.subr.mxu0 0.0
        %1253 = vmatpush1.msra.mxu0 0.0
        %1254 = vmatprep.subr.mxu0 0.0
        %1255 = vmatpush1.msra.mxu0 0.0
        %1256 = vmatprep.subr.mxu0 0.0
        %1257 = vmatpush1.msra.mxu0 0.0
        %1258 = vmatprep.subr.mxu0 0.0
        %1259 = vmatpush1.msra.mxu0 0.0
        %1260 = vmatprep.subr.mxu0 0.0
        %1261 = vmatpush1.msra.mxu0 0.0
        %1262 = vmatprep.subr.mxu0 0.0
        %1263 = vmatpush1.msra.mxu0 0.0
        %1264 = vmatprep.subr.mxu0 0.0
        %1265 = vmatpush1.msra.mxu0 0.0
        %1266 = vmatprep.mubr.f32.mxu0 0.0
        %1267 = vmatmul.mubr.f32.gmra.mrb[0].mxu0 %v1200
        %v1268 = vpop.f32.mrb[0].mxu0
        %v1269 = vadd.f32 0.0, %v1268
        %v1270 = vpop.f32.mrb[0].mxu0
        %1271 = vdwg.mxu0
        %1272 = vrot.lane.b32.xlu0 %v779, 104
        %v1273 = vpop.permute.xlu0 %1272
        %1274 = vrot.lane.b32.xlu0 %v778, 104
        %v1275 = vpop.permute.xlu0 %1274
        %v1276 = vsel %vm780, %v1273, 0
        %v1278 = vsel %vm780, %v1275, 0
        %1280 = vmatprep.subr.mxu0 0.0
        %1281 = vmatpush1.xpose.msra.mxu0 %v1278
        %1282 = vmatprep.subr.mxu0 0.0
        %1283 = vmatpush1.xpose.msra.mxu0 0.0
        %1284 = vmatprep.subr.mxu0 0.0
        %1285 = vmatpush1.xpose.msra.mxu0 0.0
        %1286 = vmatprep.subr.mxu0 0.0
        %1287 = vmatpush1.xpose.msra.mxu0 0.0
        %1288 = vmatprep.subr.mxu0 0.0
        %1289 = vmatpush1.xpose.msra.mxu0 0.0
        %1290 = vmatprep.subr.mxu0 0.0
        %1291 = vmatpush1.xpose.msra.mxu0 0.0
        %1292 = vmatprep.subr.mxu0 0.0
        %1293 = vmatpush1.xpose.msra.mxu0 0.0
        %1294 = vmatprep.subr.mxu0 0.0
        %1295 = vmatpush1.xpose.msra.mxu0 0.0
        %1296 = vmatprep.subr.mxu0 0.0
        %1297 = vmatpush1.xpose.msra.mxu0 0.0
        %1298 = vmatprep.subr.mxu0 0.0
        %1299 = vmatpush1.xpose.msra.mxu0 0.0
        %1300 = vmatprep.subr.mxu0 0.0
        %1301 = vmatpush1.xpose.msra.mxu0 0.0
        %1302 = vmatprep.subr.mxu0 0.0
        %1303 = vmatpush1.xpose.msra.mxu0 0.0
        %1304 = vmatprep.subr.mxu0 0.0
        %1305 = vmatpush1.xpose.msra.mxu0 0.0
        %1306 = vmatprep.subr.mxu0 0.0
        %1307 = vmatpush1.xpose.msra.mxu0 0.0
        %1308 = vmatprep.subr.mxu0 0.0
        %1309 = vmatpush1.xpose.msra.mxu0 0.0
        %1310 = vmatprep.subr.mxu0 0.0
        %1311 = vmatpush1.xpose.msra.mxu0 0.0
        %1312 = vmatprep.subr.mxu0 0.0
        %1313 = vmatpush1.xpose.msra.mxu0 0.0
        %1314 = vmatprep.subr.mxu0 0.0
        %1315 = vmatpush1.xpose.msra.mxu0 0.0
        %1316 = vmatprep.subr.mxu0 0.0
        %1317 = vmatpush1.xpose.msra.mxu0 0.0
        %1318 = vmatprep.subr.mxu0 0.0
        %1319 = vmatpush1.xpose.msra.mxu0 0.0
        %1320 = vmatprep.subr.mxu0 0.0
        %1321 = vmatpush1.xpose.msra.mxu0 0.0
        %1322 = vmatprep.subr.mxu0 0.0
        %1323 = vmatpush1.xpose.msra.mxu0 0.0
        %1324 = vmatprep.subr.mxu0 0.0
        %1325 = vmatpush1.xpose.msra.mxu0 0.0
        %1326 = vmatprep.subr.mxu0 0.0
        %1327 = vmatpush1.xpose.msra.mxu0 0.0
        %1328 = vmatprep.subr.mxu0 0.0
        %1329 = vmatpush1.xpose.msra.mxu0 0.0
        %1330 = vmatprep.subr.mxu0 0.0
        %1331 = vmatpush1.xpose.msra.mxu0 0.0
        %1332 = vmatprep.subr.mxu0 0.0
        %1333 = vmatpush1.xpose.msra.mxu0 0.0
        %1334 = vmatprep.subr.mxu0 0.0
        %1335 = vmatpush1.xpose.msra.mxu0 0.0
        %1336 = vmatprep.subr.mxu0 0.0
        %1337 = vmatpush1.xpose.msra.mxu0 0.0
        %1338 = vmatprep.subr.mxu0 0.0
        %1339 = vmatpush1.xpose.msra.mxu0 0.0
        %1340 = vmatprep.subr.mxu0 0.0
        %1341 = vmatpush1.xpose.msra.mxu0 0.0
        %1342 = vmatprep.subr.mxu0 0.0
        %1343 = vmatpush1.xpose.msra.mxu0 0.0
        %1344 = vmatprep.mubr.f32.mxu0 0.0
        %1345 = vmatmul.mubr.f32.gmra.mrb[0].mxu0 %v1276
        %v1346 = vpop.f32.mrb[0].mxu0
        %v1347 = vadd.f32 0.0, %v1346
        %v1348 = vpop.f32.mrb[0].mxu0
        %1349 = vdwg.mxu0
        %v1350 = vsel %vm780, %v1347, -inf
        %1351 = vmax.xlane.f32.xlu0 %v1350
        %v1352 = vpop.xlane.xlu0 %1351
        %v1353 = vsub.f32 %v1347, %v1352
        %v1354 = vmul.f32 %v1353, 1.442695
        %v1355 = vpow.pop %v1354
        %v1356 = vsel %vm780, %v1355, 0.0
        %1357 = vadd.xlane.f32.xlu0 %v1356
        %v1358 = vpop.xlane.xlu0 %1357
        %v1359 = vrcp.pop %v1358
        %v1360 = vmul.f32 %v1355, %v1359
        %1361 = vrot.lane.b32.xlu0 %v618, 104
        %v1362 = vpop.permute.xlu0 %1361
        %v1365 = vsel %vm780, %v1360, 0
        %1367 = vmatprep.subr.mxu0 0.0
        %1368 = vmatpush1.msra.mxu0 %v1362
        %1369 = vmatprep.subr.mxu0 0.0
        %1370 = vmatpush1.msra.mxu0 0.0
        %1371 = vmatprep.subr.mxu0 0.0
        %1372 = vmatpush1.msra.mxu0 0.0
        %1373 = vmatprep.subr.mxu0 0.0
        %1374 = vmatpush1.msra.mxu0 0.0
        %1375 = vmatprep.subr.mxu0 0.0
        %1376 = vmatpush1.msra.mxu0 0.0
        %1377 = vmatprep.subr.mxu0 0.0
        %1378 = vmatpush1.msra.mxu0 0.0
        %1379 = vmatprep.subr.mxu0 0.0
        %1380 = vmatpush1.msra.mxu0 0.0
        %1381 = vmatprep.subr.mxu0 0.0
        %1382 = vmatpush1.msra.mxu0 0.0
        %1383 = vmatprep.subr.mxu0 0.0
        %1384 = vmatpush1.msra.mxu0 0.0
        %1385 = vmatprep.subr.mxu0 0.0
        %1386 = vmatpush1.msra.mxu0 0.0
        %1387 = vmatprep.subr.mxu0 0.0
        %1388 = vmatpush1.msra.mxu0 0.0
        %1389 = vmatprep.subr.mxu0 0.0
        %1390 = vmatpush1.msra.mxu0 0.0
        %1391 = vmatprep.subr.mxu0 0.0
        %1392 = vmatpush1.msra.mxu0 0.0
        %1393 = vmatprep.subr.mxu0 0.0
        %1394 = vmatpush1.msra.mxu0 0.0
        %1395 = vmatprep.subr.mxu0 0.0
        %1396 = vmatpush1.msra.mxu0 0.0
        %1397 = vmatprep.subr.mxu0 0.0
        %1398 = vmatpush1.msra.mxu0 0.0
        %1399 = vmatprep.subr.mxu0 0.0
        %1400 = vmatpush1.msra.mxu0 0.0
        %1401 = vmatprep.subr.mxu0 0.0
        %1402 = vmatpush1.msra.mxu0 0.0
        %1403 = vmatprep.subr.mxu0 0.0
        %1404 = vmatpush1.msra.mxu0 0.0
        %1405 = vmatprep.subr.mxu0 0.0
        %1406 = vmatpush1.msra.mxu0 0.0
        %1407 = vmatprep.subr.mxu0 0.0
        %1408 = vmatpush1.msra.mxu0 0.0
        %1409 = vmatprep.subr.mxu0 0.0
        %1410 = vmatpush1.msra.mxu0 0.0
        %1411 = vmatprep.subr.mxu0 0.0
        %1412 = vmatpush1.msra.mxu0 0.0
        %1413 = vmatprep.subr.mxu0 0.0
        %1414 = vmatpush1.msra.mxu0 0.0
        %1415 = vmatprep.subr.mxu0 0.0
        %1416 = vmatpush1.msra.mxu0 0.0
        %1417 = vmatprep.subr.mxu0 0.0
        %1418 = vmatpush1.msra.mxu0 0.0
        %1419 = vmatprep.subr.mxu0 0.0
        %1420 = vmatpush1.msra.mxu0 0.0
        %1421 = vmatprep.subr.mxu0 0.0
        %1422 = vmatpush1.msra.mxu0 0.0
        %1423 = vmatprep.subr.mxu0 0.0
        %1424 = vmatpush1.msra.mxu0 0.0
        %1425 = vmatprep.subr.mxu0 0.0
        %1426 = vmatpush1.msra.mxu0 0.0
        %1427 = vmatprep.subr.mxu0 0.0
        %1428 = vmatpush1.msra.mxu0 0.0
        %1429 = vmatprep.subr.mxu0 0.0
        %1430 = vmatpush1.msra.mxu0 0.0
        %1431 = vmatprep.mubr.f32.mxu0 0.0
        %1432 = vmatmul.mubr.f32.gmra.mrb[0].mxu0 %v1365
        %v1433 = vpop.f32.mrb[0].mxu0
        %v1434 = vadd.f32 0.0, %v1433
        %v1435 = vpop.f32.mrb[0].mxu0
        %1436 = vdwg.mxu0
        %1438 = vrot.lane.b32.xlu0 %v1104, 8
        %v1439 = vpop.permute.xlu0 %1438
        %1442 = vrot.lane.b32.xlu0 %v1269, 16
        %v1443 = vpop.permute.xlu0 %1442
        %1446 = vrot.lane.b32.xlu0 %v1434, 24
        %v1447 = vpop.permute.xlu0 %1446
        %v1449 = vsel %vm780, %v938, %v1439
        %vm1450 = vcmask 130048
        %v1451 = vsel %vm1450, %v1449, %v1443
        %vm1452 = vcmask 195584
        %v1453 = vsel %vm1452, %v1451, %v1447
        %v1454 = vld [vmem:[#allocation10] sm:$0xff]
        %v1455 = vld [vmem:[#allocation10 + $0x8] sm:$0xff]
        %v1456 = vld [vmem:[#allocation10 + $0x10] sm:$0xff]
        %v1457 = vld [vmem:[#allocation10 + $0x18] sm:$0xff]
        %v1459 = vsel %vm399, %v1453, 0
        %1461 = vmatprep.subr.mxu0 0.0
        %1462 = vmatpush1.msra.mxu0 %v1454
        %1463 = vmatprep.subr.mxu0 0.0
        %1464 = vmatpush1.msra.mxu0 %v1455
        %1465 = vmatprep.subr.mxu0 0.0
        %1466 = vmatpush1.msra.mxu0 %v1456
        %1467 = vmatprep.subr.mxu0 0.0
        %1468 = vmatpush1.msra.mxu0 %v1457
        %1469 = vmatprep.subr.mxu0 0.0
        %1470 = vmatpush1.msra.mxu0 0.0
        %1471 = vmatprep.subr.mxu0 0.0
        %1472 = vmatpush1.msra.mxu0 0.0
        %1473 = vmatprep.subr.mxu0 0.0
        %1474 = vmatpush1.msra.mxu0 0.0
        %1475 = vmatprep.subr.mxu0 0.0
        %1476 = vmatpush1.msra.mxu0 0.0
        %1477 = vmatprep.subr.mxu0 0.0
        %1478 = vmatpush1.msra.mxu0 0.0
        %1479 = vmatprep.subr.mxu0 0.0
        %1480 = vmatpush1.msra.mxu0 0.0
        %1481 = vmatprep.subr.mxu0 0.0
        %1482 = vmatpush1.msra.mxu0 0.0
        %1483 = vmatprep.subr.mxu0 0.0
        %1484 = vmatpush1.msra.mxu0 0.0
        %1485 = vmatprep.subr.mxu0 0.0
        %1486 = vmatpush1.msra.mxu0 0.0
        %1487 = vmatprep.subr.mxu0 0.0
        %1488 = vmatpush1.msra.mxu0 0.0
        %1489 = vmatprep.subr.mxu0 0.0
        %1490 = vmatpush1.msra.mxu0 0.0
        %1491 = vmatprep.subr.mxu0 0.0
        %1492 = vmatpush1.msra.mxu0 0.0
        %1493 = vmatprep.subr.mxu0 0.0
        %1494 = vmatpush1.msra.mxu0 0.0
        %1495 = vmatprep.subr.mxu0 0.0
        %1496 = vmatpush1.msra.mxu0 0.0
        %1497 = vmatprep.subr.mxu0 0.0
        %1498 = vmatpush1.msra.mxu0 0.0
        %1499 = vmatprep.subr.mxu0 0.0
        %1500 = vmatpush1.msra.mxu0 0.0
        %1501 = vmatprep.subr.mxu0 0.0
        %1502 = vmatpush1.msra.mxu0 0.0
        %1503 = vmatprep.subr.mxu0 0.0
        %1504 = vmatpush1.msra.mxu0 0.0
        %1505 = vmatprep.subr.mxu0 0.0
        %1506 = vmatpush1.msra.mxu0 0.0
        %1507 = vmatprep.subr.mxu0 0.0
        %1508 = vmatpush1.msra.mxu0 0.0
        %1509 = vmatprep.subr.mxu0 0.0
        %1510 = vmatpush1.msra.mxu0 0.0
        %1511 = vmatprep.subr.mxu0 0.0
        %1512 = vmatpush1.msra.mxu0 0.0
        %1513 = vmatprep.subr.mxu0 0.0
        %1514 = vmatpush1.msra.mxu0 0.0
        %1515 = vmatprep.subr.mxu0 0.0
        %1516 = vmatpush1.msra.mxu0 0.0
        %1517 = vmatprep.subr.mxu0 0.0
        %1518 = vmatpush1.msra.mxu0 0.0
        %1519 = vmatprep.subr.mxu0 0.0
        %1520 = vmatpush1.msra.mxu0 0.0
        %1521 = vmatprep.subr.mxu0 0.0
        %1522 = vmatpush1.msra.mxu0 0.0
        %1523 = vmatprep.subr.mxu0 0.0
        %1524 = vmatpush1.msra.mxu0 0.0
        %1525 = vmatprep.mubr.f32.mxu0 0.0
        %1526 = vmatmul.mubr.f32.gmra.mrb[0].mxu0 %v1459
        %v1527 = vpop.f32.mrb[0].mxu0
        %v1528 = vadd.f32 0.0, %v1527
        %v1529 = vpop.f32.mrb[0].mxu0
        %1530 = vdwg.mxu0
        %1531 = vst.msk [vmem:[%s393] sm:$0xff] %vm399, %v1528
        %s1532 = sand.u32 %s209, 1
        %s1533 = scalar_lea.sflag [#allocation4], %s1532
        %s1534 = sand.u32 %s209, 1
        %s1535 = smul.addr %s1534, 8
        %s1536 = scalar_lea.vmem [#allocation13], %s1535
        // Predicated region
        $region77: #{tpu_custom_call.1} parent=51 // pred_check
          %p1537 = pneg %p219
        $region78: #{tpu_custom_call.1} parent=51 // pred_check_branch
          %1539 = sbr.rel (%p1537) target = $region80
        $region79: #{tpu_custom_call.1} parent=51 // pred_region
          %s1541 = ssub.s32 128, 128
          %1542 = vsyncadd %s1533, %s1541
          %s1543 = smul.addr %s28, 128
          %s1544 = scalar_lea.hbm %s8, %s1543
          %s1546 = sshll.u32 %s1536, 4
          %s1547 = int_to_ptr.vmem [resolvable:$true] %s1546
          %1549 = dma.vmem_to_hbm [thread:$0]  %s1547, 128, %s1544, %s1533
        $region80: #{tpu_custom_call.1} parent=51 // pred_fallthru
          _
      $region52: #{tpu_custom_call.1} parent=5 // pred_fallthru
        _
      %p1550 = scmp.le.s32.totalorder 2, %s23
      // Predicated region
      $region81: #{tpu_custom_call.1} parent=5 // pred_check
        %p1551 = pneg %p1550
      $region82: #{tpu_custom_call.1} parent=5 // pred_check_branch
        %1553 = sbr.rel (%p1551) target = $region84
      $region83: #{tpu_custom_call.1} parent=5 // pred_region
        %s1554 = ssub.s32 %s23, 2
        // Predicated region
        $region85: #{tpu_custom_call.1} parent=83 // pred_check
          %p1555 = pneg %p225
        $region86: #{tpu_custom_call.1} parent=83 // pred_check_branch
          %1557 = sbr.rel (%p1555) target = $region88
        $region87: #{tpu_custom_call.1} parent=83 // pred_region
          %s1558 = sand.u32 %s210, 1
          %s1559 = scalar_lea.sflag [#allocation4], %s1558
          %s1560 = sand.u32 %s210, 1
          %s1561 = smul.addr %s1560, 8
          %s1562 = scalar_lea.vmem [#allocation13], %s1561
          %1563 = dma.done %s1559, 128
        $region88: #{tpu_custom_call.1} parent=83 // pred_fallthru
          _
      $region84: #{tpu_custom_call.1} parent=5 // pred_fallthru
        _
    $region6: #{tpu_custom_call.1} parent=1 // loop_footer
      %s27 = sadd.s32 1, %s23
    $region7: #{tpu_custom_call.1} parent=1 // loop_footer_branch
      %22 = sbr.rel target = $region3
    $region8: #{tpu_custom_call.1} parent=1 // loop_exit
      _
    %1564 = vsyncpa [#allocation3], 1
    %s1565 = scalar_lea.sflag [#allocation3], 1
    %1566 = vsyncpa %s1565, 1
    %1567 = vsyncpa [#allocation6], 1
    %1568 = vsyncpa [#allocation9], 1
    %1569 = vsyncpa [#allocation12], 1
    %1570 = vsyncpa [#allocation4], 1
    %s1571 = scalar_lea.sflag [#allocation4], 1
    %1572 = vsyncpa %s1571, 1

</llo_original>
